<compile_context>
chip_gen: v7x
topology: tpu7x:2x2x1
jax: 0.10.0
libtpu: 0.0.40
codegen_flags: <defaults>
</compile_context>

<pallas_src>
from functools import partial

import numpy as np
import jax
import jax.numpy as jnp
from jax import lax
from jax.experimental import pallas as pl
from jax.experimental.pallas import tpu as pltpu


def pam_kernel(x_ref, w_ref, b_ref, coef_ref, scal_ref, out_ref,
               *, C, Cq, Bt, N, W):
    f32 = jnp.float32
    bf16 = jnp.bfloat16

    x = x_ref[0]                                   # (C, Bt*N) f32
    gamma = scal_ref[0]
    beta = scal_ref[1]
    coef = coef_ref[...]                           # (18, N) premasked conv taps

    # --- stacked 1x1 convs: one lane-dense bf16 MXU matmul, f32 accumulate ---
    proj = jnp.dot(w_ref[...], x.astype(bf16),
                   preferred_element_type=f32) + b_ref[...]        # (C+2Cq, Bt*N)
    v_all = proj[:C]                               # (C,  Bt*N)
    q_all = proj[C:C + Cq]                         # (Cq, Bt*N)
    k_all = proj[C + Cq:C + 2 * Cq]                # (Cq, Bt*N)

    ones_row = jnp.ones((1, N), f32)               # key-axis reducer (lane-oriented stats)

    outs = []
    for bt in range(Bt):                           # Bt images packed in this block
        sl = slice(bt * N, (bt + 1) * N)
        q, k, v, xb = q_all[:, sl], k_all[:, sl], v_all[:, sl], x[:, sl]

        # energy[i, j] = sum_c q[c, i] * k[c, j]   (transpose-free contraction)
        energy = lax.dot_general(q.astype(bf16), k.astype(bf16),
                                 (((0,), (0,)), ((), ())),
                                 preferred_element_type=f32)        # (N, N)

        # softmax over keys (f32)
        emax = jnp.max(energy, axis=-1, keepdims=True)
        p = jnp.exp(energy - emax)
        denom = jnp.sum(p, axis=-1, keepdims=True)
        attn = p * pl.reciprocal(denom, approx=True)                # (N, N)

        # out[c, i] = sum_k v[c, k] * attn[i, k]   (no explicit transpose)
        ob = lax.dot_general(v.astype(bf16), attn.astype(bf16),
                             (((1,), (1,)), ((), ())),
                             preferred_element_type=f32)            # (C, N)

        # unbiased std over keys, one pass, result directly on the lane axis
        sum_a = lax.dot_general(ones_row, attn, (((1,), (1,)), ((), ())),
                                preferred_element_type=f32)         # (1, N)
        sum_sq = lax.dot_general(ones_row, attn * attn, (((1,), (1,)), ((), ())),
                                 preferred_element_type=f32)        # (1, N)
        mean_a = sum_a * (1.0 / N)
        var = jnp.maximum(sum_sq - sum_a * mean_a, 0.0) * (1.0 / (N - 1))
        std_row = jnp.sqrt(var)                                     # (1, N)

        avg_row = jnp.mean(v, axis=0, keepdims=True)                # (1, N)

        # 3x3 (2->1, pad=1) conv as a 9-tap stencil: lane rolls + premasked taps
        sa = jnp.concatenate([std_row * beta, avg_row], axis=0)     # (2, N)
        rw = jnp.zeros((1, N), f32)
        t = 0
        for dh in (-1, 0, 1):
            for dw in (-1, 0, 1):
                shift = dh * W + dw
                r = sa if shift == 0 else jnp.roll(sa, -shift, axis=-1)
                rw = rw + coef[t:t + 1, :] * r[0:1, :] \
                        + coef[9 + t:10 + t, :] * r[1:2, :]
                t += 1

        outs.append(gamma * (ob * rw) + xb)

    out_ref[0] = outs[0] if Bt == 1 else jnp.concatenate(outs, axis=-1)


def build_conv_coef(w1, H, W):
    """Fold the 3x3 (2->1, pad=1) conv weights and the spatial validity masks
    into per-tap coefficient maps over the flattened H*W axis.
    Rows 0..8 -> std channel, rows 9..17 -> avg channel; t = (dh+1)*3+(dw+1)."""
    w1 = np.asarray(w1, np.float32)                # (1, 2, 3, 3)
    N = H * W
    hh, ww = np.divmod(np.arange(N), W)
    coef = np.zeros((18, N), np.float32)
    t = 0
    for dh in (-1, 0, 1):
        for dw in (-1, 0, 1):
            valid = ((hh + dh >= 0) & (hh + dh < H) &
                     (ww + dw >= 0) & (ww + dw < W)).astype(np.float32)
            coef[t] = w1[0, 0, dh + 1, dw + 1] * valid
            coef[9 + t] = w1[0, 1, dh + 1, dw + 1] * valid
            t += 1
    return jnp.asarray(coef)


def pam_forward(x, params, *, lane_target=128):
    B, C, H, W = x.shape
    N = H * W
    Cq = max(C // 8, 1)

    # Pack Bt images along the lane axis so each block is >= 128 lanes wide.
    Bt = max(1, lane_target // N)
    while Bt > 1 and B % Bt != 0:
        Bt -= 1
    G = B // Bt
    L = Bt * N

    xf = x.astype(jnp.float32).reshape(B, C, N)
    x2 = xf.reshape(G, Bt, C, N).transpose(0, 2, 1, 3).reshape(G, C, L)

    # Stacked projection weights [value; query; key]; bf16 operands for the MXU.
    w_all = jnp.concatenate([params["wv"], params["wq"], params["wk"]],
                            axis=0).astype(jnp.bfloat16)            # (C+2Cq, C)
    b_all = jnp.concatenate([params["bv"], params["bq"], params["bk"]],
                            axis=0).astype(jnp.float32).reshape(-1, 1)
    Cp = C + 2 * Cq

    coef = build_conv_coef(params["w1"], H, W)                      # (18, N)
    scalars = jnp.array([params["gamma"], params["beta"]], jnp.float32)

    kernel = partial(pam_kernel, C=C, Cq=Cq, Bt=Bt, N=N, W=W)

    grid_spec = pltpu.PrefetchScalarGridSpec(
        num_scalar_prefetch=0,
        grid=(G,),
        in_specs=[
            pl.BlockSpec((1, C, L), lambda g: (g, 0, 0)),           # x (f32)
            pl.BlockSpec((Cp, C), lambda g: (0, 0)),                # stacked W (bf16)
            pl.BlockSpec((Cp, 1), lambda g: (0, 0)),                # stacked bias
            pl.BlockSpec((18, N), lambda g: (0, 0)),                # conv tap coeffs
            pl.BlockSpec(memory_space=pltpu.MemorySpace.SMEM),      # [gamma, beta]
        ],
        out_specs=pl.BlockSpec((1, C, L), lambda g: (g, 0, 0)),
    )

    out2 = pl.pallas_call(
        kernel,
        out_shape=jax.ShapeDtypeStruct((G, C, L), jnp.float32),
        grid_spec=grid_spec,
        compiler_params=pltpu.CompilerParams(
            dimension_semantics=("parallel",)),     # batch groups are independent
    )(x2, w_all, b_all, coef, scalars)

    out = (out2.reshape(G, C, Bt, N).transpose(0, 2, 1, 3)
               .reshape(B, C, H, W))
    return out


def pam_reference(x, params):
    """Pure-JAX replica of PAM_Module.forward for correctness checking."""
    B, C, H, W = x.shape
    N = H * W
    hi = lax.Precision.HIGHEST
    xf = x.reshape(B, C, N)
    q = jnp.einsum("oc,bcn->bon", params["wq"], xf, precision=hi) + params["bq"][None, :, None]
    k = jnp.einsum("oc,bcn->bon", params["wk"], xf, precision=hi) + params["bk"][None, :, None]
    v = jnp.einsum("oc,bcn->bon", params["wv"], xf, precision=hi) + params["bv"][None, :, None]
    energy = jnp.einsum("bci,bcj->bij", q, k, precision=hi)
    attn = jax.nn.softmax(energy, axis=-1)
    out = jnp.einsum("bck,bqk->bcq", v, attn, precision=hi)
    std = jnp.std(attn, axis=-1, ddof=1) * params["beta"]            # (B, N)
    avg = jnp.mean(v, axis=1)                                        # (B, N)
    rw_in = jnp.stack([std.reshape(B, H, W), avg.reshape(B, H, W)], axis=1)
    rw = lax.conv_general_dilated(rw_in, params["w1"], (1, 1), "SAME",
                                  dimension_numbers=("NCHW", "OIHW", "NCHW"),
                                  precision=hi)
    return params["gamma"] * (out.reshape(B, C, H, W) * rw) + x


if __name__ == "__main__":
    B, C, H, W = 2, 16, 8, 8        # in_dim=16 so C//8 = 2 query/key channels
    Cq = C // 8

    key = jax.random.PRNGKey(0)
    ks = jax.random.split(key, 8)
    params = dict(
        wq=jax.random.normal(ks[0], (Cq, C), jnp.float32) * 0.2,
        bq=jax.random.normal(ks[1], (Cq,), jnp.float32) * 0.1,
        wk=jax.random.normal(ks[2], (Cq, C), jnp.float32) * 0.2,
        bk=jax.random.normal(ks[3], (Cq,), jnp.float32) * 0.1,
        wv=jax.random.normal(ks[4], (C, C), jnp.float32) * 0.2,
        bv=jax.random.normal(ks[5], (C,), jnp.float32) * 0.1,
        w1=jax.random.normal(ks[6], (1, 2, 3, 3), jnp.float32) * 0.2,
        # Module __init__ sets gamma=0 (output would equal x); use a nonzero
        # value so the attention path is actually exercised. beta init = 500.
        gamma=jnp.float32(0.1),
        beta=jnp.float32(500.0),
    )
    x = jax.random.normal(ks[7], (B, C, H, W), jnp.float32)

    out = jax.block_until_ready(pam_forward(x, params))
    ref = jax.block_until_ready(pam_reference(x, params))
    # bf16 MXU operands (vs the f32 HIGHEST-precision reference) combined with
    # the module's beta=500 amplification of std(attention) give ~1e-2-level
    # element-wise differences; 2e-2 is the standard mixed-precision tolerance.
    np.testing.assert_allclose(np.asarray(out), np.asarray(ref), rtol=2e-2, atol=2e-2)
    print("KERNEL_OK")
</pallas_src>

<mosaic_0001>
module attributes {stable_mosaic.version = 11 : i64} {
  func.func @pam_kernel(%arg0: i32, %arg1: memref<1x16x128xf32, #tpu.memory_space<vmem>>, %arg2: memref<20x16xbf16, #tpu.memory_space<vmem>>, %arg3: memref<20x1xf32, #tpu.memory_space<vmem>>, %arg4: memref<18x64xf32, #tpu.memory_space<vmem>>, %arg5: memref<2xf32, #tpu.memory_space<smem>>, %arg6: memref<1x16x128xf32, #tpu.memory_space<vmem>>) attributes {dimension_semantics = [#tpu.dimension_semantics<parallel>], iteration_bounds = array<i64: 1>, scalar_prefetch = 0 : i64, scratch_operands = 0 : i64, tpu.core_type = #tpu.core_type<tc>, window_params = [{transform_indices = @transform_0, window_bounds = array<i64: 1, 16, 128>}, {pipeline_mode = #tpu.pipeline_mode<synchronous>, transform_indices = @transform_1, window_bounds = array<i64: 20, 16>}, {pipeline_mode = #tpu.pipeline_mode<synchronous>, transform_indices = @transform_2, window_bounds = array<i64: 20, 1>}, {pipeline_mode = #tpu.pipeline_mode<synchronous>, transform_indices = @transform_3, window_bounds = array<i64: 18, 64>}, {transform_indices = @transform_4, window_bounds = array<i64: 2>}, {transform_indices = @transform_5, window_bounds = array<i64: 1, 16, 128>}]} {
    %c0 = arith.constant 0 : index
    %c0_0 = arith.constant 0 : index
    %c0_1 = arith.constant 0 : index
    %0 = vector.load %arg1[%c0, %c0_0, %c0_1] : memref<1x16x128xf32, #tpu.memory_space<vmem>>, vector<1x16x128xf32>
    %1 = vector.shape_cast %0 : vector<1x16x128xf32> to vector<16x128xf32>
    %c0_2 = arith.constant 0 : index
    %2 = memref.load %arg5[%c0_2] : memref<2xf32, #tpu.memory_space<smem>>
    %c1 = arith.constant 1 : index
    %3 = memref.load %arg5[%c1] : memref<2xf32, #tpu.memory_space<smem>>
    %c0_3 = arith.constant 0 : index
    %c0_4 = arith.constant 0 : index
    %4 = vector.load %arg4[%c0_3, %c0_4] : memref<18x64xf32, #tpu.memory_space<vmem>>, vector<18x64xf32>
    %c0_5 = arith.constant 0 : index
    %c0_6 = arith.constant 0 : index
    %5 = vector.load %arg2[%c0_5, %c0_6] : memref<20x16xbf16, #tpu.memory_space<vmem>>, vector<20x16xbf16>
    %6 = arith.truncf %1 : vector<16x128xf32> to vector<16x128xbf16>
    %cst = arith.constant dense<0.000000e+00> : vector<20x128xf32>
    %7 = tpu.matmul %5, %6, %cst {dimension_numbers = #tpu.dot_dimension_numbers<[1], [0], [0], [1], [0, 0, 1, 1], [], []>} : vector<20x16xbf16>, vector<16x128xbf16>, vector<20x128xf32> -> vector<20x128xf32>
    %c0_7 = arith.constant 0 : index
    %c0_8 = arith.constant 0 : index
    %8 = vector.load %arg3[%c0_7, %c0_8] : memref<20x1xf32, #tpu.memory_space<vmem>>, vector<20x1xf32>
    %9 = vector.broadcast %8 : vector<20x1xf32> to vector<20x128xf32>
    %10 = arith.addf %7, %9 : vector<20x128xf32>
    %11 = vector.extract_strided_slice %10 {offsets = [0, 0], sizes = [16, 128], strides = [1, 1]} : vector<20x128xf32> to vector<16x128xf32>
    %12 = vector.extract_strided_slice %10 {offsets = [16, 0], sizes = [2, 128], strides = [1, 1]} : vector<20x128xf32> to vector<2x128xf32>
    %13 = vector.extract_strided_slice %10 {offsets = [18, 0], sizes = [2, 128], strides = [1, 1]} : vector<20x128xf32> to vector<2x128xf32>
    %cst_9 = arith.constant 1.000000e+00 : f32
    %14 = vector.broadcast %cst_9 : f32 to vector<1x64xf32>
    %15 = vector.extract_strided_slice %12 {offsets = [0, 0], sizes = [2, 64], strides = [1, 1]} : vector<2x128xf32> to vector<2x64xf32>
    %16 = vector.extract_strided_slice %13 {offsets = [0, 0], sizes = [2, 64], strides = [1, 1]} : vector<2x128xf32> to vector<2x64xf32>
    %17 = vector.extract_strided_slice %11 {offsets = [0, 0], sizes = [16, 64], strides = [1, 1]} : vector<16x128xf32> to vector<16x64xf32>
    %18 = vector.extract_strided_slice %1 {offsets = [0, 0], sizes = [16, 64], strides = [1, 1]} : vector<16x128xf32> to vector<16x64xf32>
    %19 = arith.truncf %15 : vector<2x64xf32> to vector<2x64xbf16>
    %20 = arith.truncf %16 : vector<2x64xf32> to vector<2x64xbf16>
    %cst_10 = arith.constant dense<0.000000e+00> : vector<64x64xf32>
    %21 = tpu.matmul %19, %20, %cst_10 {dimension_numbers = #tpu.dot_dimension_numbers<[0], [0], [1], [1], [0, 1, 1, 1], [], []>} : vector<2x64xbf16>, vector<2x64xbf16>, vector<64x64xf32> -> vector<64x64xf32>
    %cst_11 = arith.constant dense<0xFF800000> : vector<64xf32>
    %22 = vector.multi_reduction <maximumf>, %21, %cst_11 [1] : vector<64x64xf32> to vector<64xf32>
    %23 = vector.shape_cast %22 : vector<64xf32> to vector<64x1xf32>
    %24 = vector.broadcast %23 : vector<64x1xf32> to vector<64x64xf32>
    %25 = arith.subf %21, %24 : vector<64x64xf32>
    %26 = math.exp %25 : vector<64x64xf32>
    %cst_12 = arith.constant dense<0.000000e+00> : vector<64xf32>
    %27 = vector.multi_reduction <add>, %26, %cst_12 [1] : vector<64x64xf32> to vector<64xf32>
    %28 = vector.shape_cast %27 : vector<64xf32> to vector<64x1xf32>
    %29 = tpu.reciprocal %28 {approx = true} : vector<64x1xf32> -> vector<64x1xf32>
    %30 = vector.broadcast %29 : vector<64x1xf32> to vector<64x64xf32>
    %31 = arith.mulf %26, %30 : vector<64x64xf32>
    %32 = arith.truncf %17 : vector<16x64xf32> to vector<16x64xbf16>
    %33 = arith.truncf %31 : vector<64x64xf32> to vector<64x64xbf16>
    %cst_13 = arith.constant dense<0.000000e+00> : vector<16x64xf32>
    %34 = tpu.matmul %32, %33, %cst_13 {dimension_numbers = #tpu.dot_dimension_numbers<[1], [1], [0], [0], [0, 0, 1, 0], [], []>} : vector<16x64xbf16>, vector<64x64xbf16>, vector<16x64xf32> -> vector<16x64xf32>
    %cst_14 = arith.constant dense<0.000000e+00> : vector<1x64xf32>
    %35 = tpu.matmul %14, %31, %cst_14 {dimension_numbers = #tpu.dot_dimension_numbers<[1], [1], [0], [0], [0, 0, 1, 0], [], []>} : vector<1x64xf32>, vector<64x64xf32>, vector<1x64xf32> -> vector<1x64xf32>
    %36 = arith.mulf %31, %31 : vector<64x64xf32>
    %cst_15 = arith.constant dense<0.000000e+00> : vector<1x64xf32>
    %37 = tpu.matmul %14, %36, %cst_15 {dimension_numbers = #tpu.dot_dimension_numbers<[1], [1], [0], [0], [0, 0, 1, 0], [], []>} : vector<1x64xf32>, vector<64x64xf32>, vector<1x64xf32> -> vector<1x64xf32>
    %cst_16 = arith.constant 1.562500e-02 : f32
    %38 = vector.broadcast %cst_16 : f32 to vector<1x64xf32>
    %39 = arith.mulf %35, %38 : vector<1x64xf32>
    %40 = arith.mulf %35, %39 : vector<1x64xf32>
    %41 = arith.subf %37, %40 : vector<1x64xf32>
    %cst_17 = arith.constant 0.000000e+00 : f32
    %42 = vector.broadcast %cst_17 : f32 to vector<1x64xf32>
    %43 = arith.maximumf %41, %42 : vector<1x64xf32>
    %cst_18 = arith.constant 0.0158730168 : f32
    %44 = vector.broadcast %cst_18 : f32 to vector<1x64xf32>
    %45 = arith.mulf %43, %44 : vector<1x64xf32>
    %46 = math.sqrt %45 : vector<1x64xf32>
    %cst_19 = arith.constant dense<0.000000e+00> : vector<64xf32>
    %47 = vector.multi_reduction <add>, %17, %cst_19 [0] : vector<16x64xf32> to vector<64xf32>
    %48 = vector.shape_cast %47 : vector<64xf32> to vector<1x64xf32>
    %cst_20 = arith.constant 1.600000e+01 : f32
    %49 = vector.broadcast %cst_20 : f32 to vector<1x64xf32>
    %50 = arith.divf %48, %49 : vector<1x64xf32>
    %51 = vector.broadcast %3 : f32 to vector<1x64xf32>
    %52 = arith.mulf %46, %51 : vector<1x64xf32>
    %53 = tpu.concatenate %52, %50 in 0 : vector<1x64xf32>, vector<1x64xf32> -> vector<2x64xf32>
    %cst_21 = arith.constant 0.000000e+00 : f32
    %54 = vector.broadcast %cst_21 : f32 to vector<1x64xf32>
    %55 = vector.extract_strided_slice %53 {offsets = [0, 55], sizes = [2, 9], strides = [1, 1]} : vector<2x64xf32> to vector<2x9xf32>
    %56 = vector.extract_strided_slice %53 {offsets = [0, 0], sizes = [2, 55], strides = [1, 1]} : vector<2x64xf32> to vector<2x55xf32>
    %57 = tpu.concatenate %55, %56 in 1 : vector<2x9xf32>, vector<2x55xf32> -> vector<2x64xf32>
    %58 = vector.extract_strided_slice %4 {offsets = [0, 0], sizes = [1, 64], strides = [1, 1]} : vector<18x64xf32> to vector<1x64xf32>
    %59 = vector.extract_strided_slice %57 {offsets = [0, 0], sizes = [1, 64], strides = [1, 1]} : vector<2x64xf32> to vector<1x64xf32>
    %60 = arith.mulf %58, %59 : vector<1x64xf32>
    %61 = arith.addf %54, %60 : vector<1x64xf32>
    %62 = vector.extract_strided_slice %4 {offsets = [9, 0], sizes = [1, 64], strides = [1, 1]} : vector<18x64xf32> to vector<1x64xf32>
    %63 = vector.extract_strided_slice %57 {offsets = [1, 0], sizes = [1, 64], strides = [1, 1]} : vector<2x64xf32> to vector<1x64xf32>
    %64 = arith.mulf %62, %63 : vector<1x64xf32>
    %65 = arith.addf %61, %64 : vector<1x64xf32>
    %66 = vector.extract_strided_slice %53 {offsets = [0, 56], sizes = [2, 8], strides = [1, 1]} : vector<2x64xf32> to vector<2x8xf32>
    %67 = vector.extract_strided_slice %53 {offsets = [0, 0], sizes = [2, 56], strides = [1, 1]} : vector<2x64xf32> to vector<2x56xf32>
    %68 = tpu.concatenate %66, %67 in 1 : vector<2x8xf32>, vector<2x56xf32> -> vector<2x64xf32>
    %69 = vector.extract_strided_slice %4 {offsets = [1, 0], sizes = [1, 64], strides = [1, 1]} : vector<18x64xf32> to vector<1x64xf32>
    %70 = vector.extract_strided_slice %68 {offsets = [0, 0], sizes = [1, 64], strides = [1, 1]} : vector<2x64xf32> to vector<1x64xf32>
    %71 = arith.mulf %69, %70 : vector<1x64xf32>
    %72 = arith.addf %65, %71 : vector<1x64xf32>
    %73 = vector.extract_strided_slice %4 {offsets = [10, 0], sizes = [1, 64], strides = [1, 1]} : vector<18x64xf32> to vector<1x64xf32>
    %74 = vector.extract_strided_slice %68 {offsets = [1, 0], sizes = [1, 64], strides = [1, 1]} : vector<2x64xf32> to vector<1x64xf32>
    %75 = arith.mulf %73, %74 : vector<1x64xf32>
    %76 = arith.addf %72, %75 : vector<1x64xf32>
    %77 = vector.extract_strided_slice %53 {offsets = [0, 57], sizes = [2, 7], strides = [1, 1]} : vector<2x64xf32> to vector<2x7xf32>
    %78 = vector.extract_strided_slice %53 {offsets = [0, 0], sizes = [2, 57], strides = [1, 1]} : vector<2x64xf32> to vector<2x57xf32>
    %79 = tpu.concatenate %77, %78 in 1 : vector<2x7xf32>, vector<2x57xf32> -> vector<2x64xf32>
    %80 = vector.extract_strided_slice %4 {offsets = [2, 0], sizes = [1, 64], strides = [1, 1]} : vector<18x64xf32> to vector<1x64xf32>
    %81 = vector.extract_strided_slice %79 {offsets = [0, 0], sizes = [1, 64], strides = [1, 1]} : vector<2x64xf32> to vector<1x64xf32>
    %82 = arith.mulf %80, %81 : vector<1x64xf32>
    %83 = arith.addf %76, %82 : vector<1x64xf32>
    %84 = vector.extract_strided_slice %4 {offsets = [11, 0], sizes = [1, 64], strides = [1, 1]} : vector<18x64xf32> to vector<1x64xf32>
    %85 = vector.extract_strided_slice %79 {offsets = [1, 0], sizes = [1, 64], strides = [1, 1]} : vector<2x64xf32> to vector<1x64xf32>
    %86 = arith.mulf %84, %85 : vector<1x64xf32>
    %87 = arith.addf %83, %86 : vector<1x64xf32>
    %88 = vector.extract_strided_slice %53 {offsets = [0, 63], sizes = [2, 1], strides = [1, 1]} : vector<2x64xf32> to vector<2x1xf32>
    %89 = vector.extract_strided_slice %53 {offsets = [0, 0], sizes = [2, 63], strides = [1, 1]} : vector<2x64xf32> to vector<2x63xf32>
    %90 = tpu.concatenate %88, %89 in 1 : vector<2x1xf32>, vector<2x63xf32> -> vector<2x64xf32>
    %91 = vector.extract_strided_slice %4 {offsets = [3, 0], sizes = [1, 64], strides = [1, 1]} : vector<18x64xf32> to vector<1x64xf32>
    %92 = vector.extract_strided_slice %90 {offsets = [0, 0], sizes = [1, 64], strides = [1, 1]} : vector<2x64xf32> to vector<1x64xf32>
    %93 = arith.mulf %91, %92 : vector<1x64xf32>
    %94 = arith.addf %87, %93 : vector<1x64xf32>
    %95 = vector.extract_strided_slice %4 {offsets = [12, 0], sizes = [1, 64], strides = [1, 1]} : vector<18x64xf32> to vector<1x64xf32>
    %96 = vector.extract_strided_slice %90 {offsets = [1, 0], sizes = [1, 64], strides = [1, 1]} : vector<2x64xf32> to vector<1x64xf32>
    %97 = arith.mulf %95, %96 : vector<1x64xf32>
    %98 = arith.addf %94, %97 : vector<1x64xf32>
    %99 = vector.extract_strided_slice %4 {offsets = [4, 0], sizes = [1, 64], strides = [1, 1]} : vector<18x64xf32> to vector<1x64xf32>
    %100 = vector.extract_strided_slice %53 {offsets = [0, 0], sizes = [1, 64], strides = [1, 1]} : vector<2x64xf32> to vector<1x64xf32>
    %101 = arith.mulf %99, %100 : vector<1x64xf32>
    %102 = arith.addf %98, %101 : vector<1x64xf32>
    %103 = vector.extract_strided_slice %4 {offsets = [13, 0], sizes = [1, 64], strides = [1, 1]} : vector<18x64xf32> to vector<1x64xf32>
    %104 = vector.extract_strided_slice %53 {offsets = [1, 0], sizes = [1, 64], strides = [1, 1]} : vector<2x64xf32> to vector<1x64xf32>
    %105 = arith.mulf %103, %104 : vector<1x64xf32>
    %106 = arith.addf %102, %105 : vector<1x64xf32>
    %107 = vector.extract_strided_slice %53 {offsets = [0, 1], sizes = [2, 63], strides = [1, 1]} : vector<2x64xf32> to vector<2x63xf32>
    %108 = vector.extract_strided_slice %53 {offsets = [0, 0], sizes = [2, 1], strides = [1, 1]} : vector<2x64xf32> to vector<2x1xf32>
    %109 = tpu.concatenate %107, %108 in 1 : vector<2x63xf32>, vector<2x1xf32> -> vector<2x64xf32>
    %110 = vector.extract_strided_slice %4 {offsets = [5, 0], sizes = [1, 64], strides = [1, 1]} : vector<18x64xf32> to vector<1x64xf32>
    %111 = vector.extract_strided_slice %109 {offsets = [0, 0], sizes = [1, 64], strides = [1, 1]} : vector<2x64xf32> to vector<1x64xf32>
    %112 = arith.mulf %110, %111 : vector<1x64xf32>
    %113 = arith.addf %106, %112 : vector<1x64xf32>
    %114 = vector.extract_strided_slice %4 {offsets = [14, 0], sizes = [1, 64], strides = [1, 1]} : vector<18x64xf32> to vector<1x64xf32>
    %115 = vector.extract_strided_slice %109 {offsets = [1, 0], sizes = [1, 64], strides = [1, 1]} : vector<2x64xf32> to vector<1x64xf32>
    %116 = arith.mulf %114, %115 : vector<1x64xf32>
    %117 = arith.addf %113, %116 : vector<1x64xf32>
    %118 = vector.extract_strided_slice %53 {offsets = [0, 7], sizes = [2, 57], strides = [1, 1]} : vector<2x64xf32> to vector<2x57xf32>
    %119 = vector.extract_strided_slice %53 {offsets = [0, 0], sizes = [2, 7], strides = [1, 1]} : vector<2x64xf32> to vector<2x7xf32>
    %120 = tpu.concatenate %118, %119 in 1 : vector<2x57xf32>, vector<2x7xf32> -> vector<2x64xf32>
    %121 = vector.extract_strided_slice %4 {offsets = [6, 0], sizes = [1, 64], strides = [1, 1]} : vector<18x64xf32> to vector<1x64xf32>
    %122 = vector.extract_strided_slice %120 {offsets = [0, 0], sizes = [1, 64], strides = [1, 1]} : vector<2x64xf32> to vector<1x64xf32>
    %123 = arith.mulf %121, %122 : vector<1x64xf32>
    %124 = arith.addf %117, %123 : vector<1x64xf32>
    %125 = vector.extract_strided_slice %4 {offsets = [15, 0], sizes = [1, 64], strides = [1, 1]} : vector<18x64xf32> to vector<1x64xf32>
    %126 = vector.extract_strided_slice %120 {offsets = [1, 0], sizes = [1, 64], strides = [1, 1]} : vector<2x64xf32> to vector<1x64xf32>
    %127 = arith.mulf %125, %126 : vector<1x64xf32>
    %128 = arith.addf %124, %127 : vector<1x64xf32>
    %129 = vector.extract_strided_slice %53 {offsets = [0, 8], sizes = [2, 56], strides = [1, 1]} : vector<2x64xf32> to vector<2x56xf32>
    %130 = vector.extract_strided_slice %53 {offsets = [0, 0], sizes = [2, 8], strides = [1, 1]} : vector<2x64xf32> to vector<2x8xf32>
    %131 = tpu.concatenate %129, %130 in 1 : vector<2x56xf32>, vector<2x8xf32> -> vector<2x64xf32>
    %132 = vector.extract_strided_slice %4 {offsets = [7, 0], sizes = [1, 64], strides = [1, 1]} : vector<18x64xf32> to vector<1x64xf32>
    %133 = vector.extract_strided_slice %131 {offsets = [0, 0], sizes = [1, 64], strides = [1, 1]} : vector<2x64xf32> to vector<1x64xf32>
    %134 = arith.mulf %132, %133 : vector<1x64xf32>
    %135 = arith.addf %128, %134 : vector<1x64xf32>
    %136 = vector.extract_strided_slice %4 {offsets = [16, 0], sizes = [1, 64], strides = [1, 1]} : vector<18x64xf32> to vector<1x64xf32>
    %137 = vector.extract_strided_slice %131 {offsets = [1, 0], sizes = [1, 64], strides = [1, 1]} : vector<2x64xf32> to vector<1x64xf32>
    %138 = arith.mulf %136, %137 : vector<1x64xf32>
    %139 = arith.addf %135, %138 : vector<1x64xf32>
    %140 = vector.extract_strided_slice %53 {offsets = [0, 9], sizes = [2, 55], strides = [1, 1]} : vector<2x64xf32> to vector<2x55xf32>
    %141 = vector.extract_strided_slice %53 {offsets = [0, 0], sizes = [2, 9], strides = [1, 1]} : vector<2x64xf32> to vector<2x9xf32>
    %142 = tpu.concatenate %140, %141 in 1 : vector<2x55xf32>, vector<2x9xf32> -> vector<2x64xf32>
    %143 = vector.extract_strided_slice %4 {offsets = [8, 0], sizes = [1, 64], strides = [1, 1]} : vector<18x64xf32> to vector<1x64xf32>
    %144 = vector.extract_strided_slice %142 {offsets = [0, 0], sizes = [1, 64], strides = [1, 1]} : vector<2x64xf32> to vector<1x64xf32>
    %145 = arith.mulf %143, %144 : vector<1x64xf32>
    %146 = arith.addf %139, %145 : vector<1x64xf32>
    %147 = vector.extract_strided_slice %4 {offsets = [17, 0], sizes = [1, 64], strides = [1, 1]} : vector<18x64xf32> to vector<1x64xf32>
    %148 = vector.extract_strided_slice %142 {offsets = [1, 0], sizes = [1, 64], strides = [1, 1]} : vector<2x64xf32> to vector<1x64xf32>
    %149 = arith.mulf %147, %148 : vector<1x64xf32>
    %150 = arith.addf %146, %149 : vector<1x64xf32>
    %151 = vector.broadcast %150 : vector<1x64xf32> to vector<16x64xf32>
    %152 = arith.mulf %34, %151 : vector<16x64xf32>
    %153 = vector.broadcast %2 : f32 to vector<16x64xf32>
    %154 = arith.mulf %153, %152 : vector<16x64xf32>
    %155 = arith.addf %154, %18 : vector<16x64xf32>
    %156 = vector.extract_strided_slice %12 {offsets = [0, 64], sizes = [2, 64], strides = [1, 1]} : vector<2x128xf32> to vector<2x64xf32>
    %157 = vector.extract_strided_slice %13 {offsets = [0, 64], sizes = [2, 64], strides = [1, 1]} : vector<2x128xf32> to vector<2x64xf32>
    %158 = vector.extract_strided_slice %11 {offsets = [0, 64], sizes = [16, 64], strides = [1, 1]} : vector<16x128xf32> to vector<16x64xf32>
    %159 = vector.extract_strided_slice %1 {offsets = [0, 64], sizes = [16, 64], strides = [1, 1]} : vector<16x128xf32> to vector<16x64xf32>
    %160 = arith.truncf %156 : vector<2x64xf32> to vector<2x64xbf16>
    %161 = arith.truncf %157 : vector<2x64xf32> to vector<2x64xbf16>
    %cst_22 = arith.constant dense<0.000000e+00> : vector<64x64xf32>
    %162 = tpu.matmul %160, %161, %cst_22 {dimension_numbers = #tpu.dot_dimension_numbers<[0], [0], [1], [1], [0, 1, 1, 1], [], []>} : vector<2x64xbf16>, vector<2x64xbf16>, vector<64x64xf32> -> vector<64x64xf32>
    %cst_23 = arith.constant dense<0xFF800000> : vector<64xf32>
    %163 = vector.multi_reduction <maximumf>, %162, %cst_23 [1] : vector<64x64xf32> to vector<64xf32>
    %164 = vector.shape_cast %163 : vector<64xf32> to vector<64x1xf32>
    %165 = vector.broadcast %164 : vector<64x1xf32> to vector<64x64xf32>
    %166 = arith.subf %162, %165 : vector<64x64xf32>
    %167 = math.exp %166 : vector<64x64xf32>
    %cst_24 = arith.constant dense<0.000000e+00> : vector<64xf32>
    %168 = vector.multi_reduction <add>, %167, %cst_24 [1] : vector<64x64xf32> to vector<64xf32>
    %169 = vector.shape_cast %168 : vector<64xf32> to vector<64x1xf32>
    %170 = tpu.reciprocal %169 {approx = true} : vector<64x1xf32> -> vector<64x1xf32>
    %171 = vector.broadcast %170 : vector<64x1xf32> to vector<64x64xf32>
    %172 = arith.mulf %167, %171 : vector<64x64xf32>
    %173 = arith.truncf %158 : vector<16x64xf32> to vector<16x64xbf16>
    %174 = arith.truncf %172 : vector<64x64xf32> to vector<64x64xbf16>
    %cst_25 = arith.constant dense<0.000000e+00> : vector<16x64xf32>
    %175 = tpu.matmul %173, %174, %cst_25 {dimension_numbers = #tpu.dot_dimension_numbers<[1], [1], [0], [0], [0, 0, 1, 0], [], []>} : vector<16x64xbf16>, vector<64x64xbf16>, vector<16x64xf32> -> vector<16x64xf32>
    %cst_26 = arith.constant dense<0.000000e+00> : vector<1x64xf32>
    %176 = tpu.matmul %14, %172, %cst_26 {dimension_numbers = #tpu.dot_dimension_numbers<[1], [1], [0], [0], [0, 0, 1, 0], [], []>} : vector<1x64xf32>, vector<64x64xf32>, vector<1x64xf32> -> vector<1x64xf32>
    %177 = arith.mulf %172, %172 : vector<64x64xf32>
    %cst_27 = arith.constant dense<0.000000e+00> : vector<1x64xf32>
    %178 = tpu.matmul %14, %177, %cst_27 {dimension_numbers = #tpu.dot_dimension_numbers<[1], [1], [0], [0], [0, 0, 1, 0], [], []>} : vector<1x64xf32>, vector<64x64xf32>, vector<1x64xf32> -> vector<1x64xf32>
    %cst_28 = arith.constant 1.562500e-02 : f32
    %179 = vector.broadcast %cst_28 : f32 to vector<1x64xf32>
    %180 = arith.mulf %176, %179 : vector<1x64xf32>
    %181 = arith.mulf %176, %180 : vector<1x64xf32>
    %182 = arith.subf %178, %181 : vector<1x64xf32>
    %cst_29 = arith.constant 0.000000e+00 : f32
    %183 = vector.broadcast %cst_29 : f32 to vector<1x64xf32>
    %184 = arith.maximumf %182, %183 : vector<1x64xf32>
    %cst_30 = arith.constant 0.0158730168 : f32
    %185 = vector.broadcast %cst_30 : f32 to vector<1x64xf32>
    %186 = arith.mulf %184, %185 : vector<1x64xf32>
    %187 = math.sqrt %186 : vector<1x64xf32>
    %cst_31 = arith.constant dense<0.000000e+00> : vector<64xf32>
    %188 = vector.multi_reduction <add>, %158, %cst_31 [0] : vector<16x64xf32> to vector<64xf32>
    %189 = vector.shape_cast %188 : vector<64xf32> to vector<1x64xf32>
    %cst_32 = arith.constant 1.600000e+01 : f32
    %190 = vector.broadcast %cst_32 : f32 to vector<1x64xf32>
    %191 = arith.divf %189, %190 : vector<1x64xf32>
    %192 = vector.broadcast %3 : f32 to vector<1x64xf32>
    %193 = arith.mulf %187, %192 : vector<1x64xf32>
    %194 = tpu.concatenate %193, %191 in 0 : vector<1x64xf32>, vector<1x64xf32> -> vector<2x64xf32>
    %cst_33 = arith.constant 0.000000e+00 : f32
    %195 = vector.broadcast %cst_33 : f32 to vector<1x64xf32>
    %196 = vector.extract_strided_slice %194 {offsets = [0, 55], sizes = [2, 9], strides = [1, 1]} : vector<2x64xf32> to vector<2x9xf32>
    %197 = vector.extract_strided_slice %194 {offsets = [0, 0], sizes = [2, 55], strides = [1, 1]} : vector<2x64xf32> to vector<2x55xf32>
    %198 = tpu.concatenate %196, %197 in 1 : vector<2x9xf32>, vector<2x55xf32> -> vector<2x64xf32>
    %199 = vector.extract_strided_slice %4 {offsets = [0, 0], sizes = [1, 64], strides = [1, 1]} : vector<18x64xf32> to vector<1x64xf32>
    %200 = vector.extract_strided_slice %198 {offsets = [0, 0], sizes = [1, 64], strides = [1, 1]} : vector<2x64xf32> to vector<1x64xf32>
    %201 = arith.mulf %199, %200 : vector<1x64xf32>
    %202 = arith.addf %195, %201 : vector<1x64xf32>
    %203 = vector.extract_strided_slice %4 {offsets = [9, 0], sizes = [1, 64], strides = [1, 1]} : vector<18x64xf32> to vector<1x64xf32>
    %204 = vector.extract_strided_slice %198 {offsets = [1, 0], sizes = [1, 64], strides = [1, 1]} : vector<2x64xf32> to vector<1x64xf32>
    %205 = arith.mulf %203, %204 : vector<1x64xf32>
    %206 = arith.addf %202, %205 : vector<1x64xf32>
    %207 = vector.extract_strided_slice %194 {offsets = [0, 56], sizes = [2, 8], strides = [1, 1]} : vector<2x64xf32> to vector<2x8xf32>
    %208 = vector.extract_strided_slice %194 {offsets = [0, 0], sizes = [2, 56], strides = [1, 1]} : vector<2x64xf32> to vector<2x56xf32>
    %209 = tpu.concatenate %207, %208 in 1 : vector<2x8xf32>, vector<2x56xf32> -> vector<2x64xf32>
    %210 = vector.extract_strided_slice %4 {offsets = [1, 0], sizes = [1, 64], strides = [1, 1]} : vector<18x64xf32> to vector<1x64xf32>
    %211 = vector.extract_strided_slice %209 {offsets = [0, 0], sizes = [1, 64], strides = [1, 1]} : vector<2x64xf32> to vector<1x64xf32>
    %212 = arith.mulf %210, %211 : vector<1x64xf32>
    %213 = arith.addf %206, %212 : vector<1x64xf32>
    %214 = vector.extract_strided_slice %4 {offsets = [10, 0], sizes = [1, 64], strides = [1, 1]} : vector<18x64xf32> to vector<1x64xf32>
    %215 = vector.extract_strided_slice %209 {offsets = [1, 0], sizes = [1, 64], strides = [1, 1]} : vector<2x64xf32> to vector<1x64xf32>
    %216 = arith.mulf %214, %215 : vector<1x64xf32>
    %217 = arith.addf %213, %216 : vector<1x64xf32>
    %218 = vector.extract_strided_slice %194 {offsets = [0, 57], sizes = [2, 7], strides = [1, 1]} : vector<2x64xf32> to vector<2x7xf32>
    %219 = vector.extract_strided_slice %194 {offsets = [0, 0], sizes = [2, 57], strides = [1, 1]} : vector<2x64xf32> to vector<2x57xf32>
    %220 = tpu.concatenate %218, %219 in 1 : vector<2x7xf32>, vector<2x57xf32> -> vector<2x64xf32>
    %221 = vector.extract_strided_slice %4 {offsets = [2, 0], sizes = [1, 64], strides = [1, 1]} : vector<18x64xf32> to vector<1x64xf32>
    %222 = vector.extract_strided_slice %220 {offsets = [0, 0], sizes = [1, 64], strides = [1, 1]} : vector<2x64xf32> to vector<1x64xf32>
    %223 = arith.mulf %221, %222 : vector<1x64xf32>
    %224 = arith.addf %217, %223 : vector<1x64xf32>
    %225 = vector.extract_strided_slice %4 {offsets = [11, 0], sizes = [1, 64], strides = [1, 1]} : vector<18x64xf32> to vector<1x64xf32>
    %226 = vector.extract_strided_slice %220 {offsets = [1, 0], sizes = [1, 64], strides = [1, 1]} : vector<2x64xf32> to vector<1x64xf32>
    %227 = arith.mulf %225, %226 : vector<1x64xf32>
    %228 = arith.addf %224, %227 : vector<1x64xf32>
    %229 = vector.extract_strided_slice %194 {offsets = [0, 63], sizes = [2, 1], strides = [1, 1]} : vector<2x64xf32> to vector<2x1xf32>
    %230 = vector.extract_strided_slice %194 {offsets = [0, 0], sizes = [2, 63], strides = [1, 1]} : vector<2x64xf32> to vector<2x63xf32>
    %231 = tpu.concatenate %229, %230 in 1 : vector<2x1xf32>, vector<2x63xf32> -> vector<2x64xf32>
    %232 = vector.extract_strided_slice %4 {offsets = [3, 0], sizes = [1, 64], strides = [1, 1]} : vector<18x64xf32> to vector<1x64xf32>
    %233 = vector.extract_strided_slice %231 {offsets = [0, 0], sizes = [1, 64], strides = [1, 1]} : vector<2x64xf32> to vector<1x64xf32>
    %234 = arith.mulf %232, %233 : vector<1x64xf32>
    %235 = arith.addf %228, %234 : vector<1x64xf32>
    %236 = vector.extract_strided_slice %4 {offsets = [12, 0], sizes = [1, 64], strides = [1, 1]} : vector<18x64xf32> to vector<1x64xf32>
    %237 = vector.extract_strided_slice %231 {offsets = [1, 0], sizes = [1, 64], strides = [1, 1]} : vector<2x64xf32> to vector<1x64xf32>
    %238 = arith.mulf %236, %237 : vector<1x64xf32>
    %239 = arith.addf %235, %238 : vector<1x64xf32>
    %240 = vector.extract_strided_slice %4 {offsets = [4, 0], sizes = [1, 64], strides = [1, 1]} : vector<18x64xf32> to vector<1x64xf32>
    %241 = vector.extract_strided_slice %194 {offsets = [0, 0], sizes = [1, 64], strides = [1, 1]} : vector<2x64xf32> to vector<1x64xf32>
    %242 = arith.mulf %240, %241 : vector<1x64xf32>
    %243 = arith.addf %239, %242 : vector<1x64xf32>
    %244 = vector.extract_strided_slice %4 {offsets = [13, 0], sizes = [1, 64], strides = [1, 1]} : vector<18x64xf32> to vector<1x64xf32>
    %245 = vector.extract_strided_slice %194 {offsets = [1, 0], sizes = [1, 64], strides = [1, 1]} : vector<2x64xf32> to vector<1x64xf32>
    %246 = arith.mulf %244, %245 : vector<1x64xf32>
    %247 = arith.addf %243, %246 : vector<1x64xf32>
    %248 = vector.extract_strided_slice %194 {offsets = [0, 1], sizes = [2, 63], strides = [1, 1]} : vector<2x64xf32> to vector<2x63xf32>
    %249 = vector.extract_strided_slice %194 {offsets = [0, 0], sizes = [2, 1], strides = [1, 1]} : vector<2x64xf32> to vector<2x1xf32>
    %250 = tpu.concatenate %248, %249 in 1 : vector<2x63xf32>, vector<2x1xf32> -> vector<2x64xf32>
    %251 = vector.extract_strided_slice %4 {offsets = [5, 0], sizes = [1, 64], strides = [1, 1]} : vector<18x64xf32> to vector<1x64xf32>
    %252 = vector.extract_strided_slice %250 {offsets = [0, 0], sizes = [1, 64], strides = [1, 1]} : vector<2x64xf32> to vector<1x64xf32>
    %253 = arith.mulf %251, %252 : vector<1x64xf32>
    %254 = arith.addf %247, %253 : vector<1x64xf32>
    %255 = vector.extract_strided_slice %4 {offsets = [14, 0], sizes = [1, 64], strides = [1, 1]} : vector<18x64xf32> to vector<1x64xf32>
    %256 = vector.extract_strided_slice %250 {offsets = [1, 0], sizes = [1, 64], strides = [1, 1]} : vector<2x64xf32> to vector<1x64xf32>
    %257 = arith.mulf %255, %256 : vector<1x64xf32>
    %258 = arith.addf %254, %257 : vector<1x64xf32>
    %259 = vector.extract_strided_slice %194 {offsets = [0, 7], sizes = [2, 57], strides = [1, 1]} : vector<2x64xf32> to vector<2x57xf32>
    %260 = vector.extract_strided_slice %194 {offsets = [0, 0], sizes = [2, 7], strides = [1, 1]} : vector<2x64xf32> to vector<2x7xf32>
    %261 = tpu.concatenate %259, %260 in 1 : vector<2x57xf32>, vector<2x7xf32> -> vector<2x64xf32>
    %262 = vector.extract_strided_slice %4 {offsets = [6, 0], sizes = [1, 64], strides = [1, 1]} : vector<18x64xf32> to vector<1x64xf32>
    %263 = vector.extract_strided_slice %261 {offsets = [0, 0], sizes = [1, 64], strides = [1, 1]} : vector<2x64xf32> to vector<1x64xf32>
    %264 = arith.mulf %262, %263 : vector<1x64xf32>
    %265 = arith.addf %258, %264 : vector<1x64xf32>
    %266 = vector.extract_strided_slice %4 {offsets = [15, 0], sizes = [1, 64], strides = [1, 1]} : vector<18x64xf32> to vector<1x64xf32>
    %267 = vector.extract_strided_slice %261 {offsets = [1, 0], sizes = [1, 64], strides = [1, 1]} : vector<2x64xf32> to vector<1x64xf32>
    %268 = arith.mulf %266, %267 : vector<1x64xf32>
    %269 = arith.addf %265, %268 : vector<1x64xf32>
    %270 = vector.extract_strided_slice %194 {offsets = [0, 8], sizes = [2, 56], strides = [1, 1]} : vector<2x64xf32> to vector<2x56xf32>
    %271 = vector.extract_strided_slice %194 {offsets = [0, 0], sizes = [2, 8], strides = [1, 1]} : vector<2x64xf32> to vector<2x8xf32>
    %272 = tpu.concatenate %270, %271 in 1 : vector<2x56xf32>, vector<2x8xf32> -> vector<2x64xf32>
    %273 = vector.extract_strided_slice %4 {offsets = [7, 0], sizes = [1, 64], strides = [1, 1]} : vector<18x64xf32> to vector<1x64xf32>
    %274 = vector.extract_strided_slice %272 {offsets = [0, 0], sizes = [1, 64], strides = [1, 1]} : vector<2x64xf32> to vector<1x64xf32>
    %275 = arith.mulf %273, %274 : vector<1x64xf32>
    %276 = arith.addf %269, %275 : vector<1x64xf32>
    %277 = vector.extract_strided_slice %4 {offsets = [16, 0], sizes = [1, 64], strides = [1, 1]} : vector<18x64xf32> to vector<1x64xf32>
    %278 = vector.extract_strided_slice %272 {offsets = [1, 0], sizes = [1, 64], strides = [1, 1]} : vector<2x64xf32> to vector<1x64xf32>
    %279 = arith.mulf %277, %278 : vector<1x64xf32>
    %280 = arith.addf %276, %279 : vector<1x64xf32>
    %281 = vector.extract_strided_slice %194 {offsets = [0, 9], sizes = [2, 55], strides = [1, 1]} : vector<2x64xf32> to vector<2x55xf32>
    %282 = vector.extract_strided_slice %194 {offsets = [0, 0], sizes = [2, 9], strides = [1, 1]} : vector<2x64xf32> to vector<2x9xf32>
    %283 = tpu.concatenate %281, %282 in 1 : vector<2x55xf32>, vector<2x9xf32> -> vector<2x64xf32>
    %284 = vector.extract_strided_slice %4 {offsets = [8, 0], sizes = [1, 64], strides = [1, 1]} : vector<18x64xf32> to vector<1x64xf32>
    %285 = vector.extract_strided_slice %283 {offsets = [0, 0], sizes = [1, 64], strides = [1, 1]} : vector<2x64xf32> to vector<1x64xf32>
    %286 = arith.mulf %284, %285 : vector<1x64xf32>
    %287 = arith.addf %280, %286 : vector<1x64xf32>
    %288 = vector.extract_strided_slice %4 {offsets = [17, 0], sizes = [1, 64], strides = [1, 1]} : vector<18x64xf32> to vector<1x64xf32>
    %289 = vector.extract_strided_slice %283 {offsets = [1, 0], sizes = [1, 64], strides = [1, 1]} : vector<2x64xf32> to vector<1x64xf32>
    %290 = arith.mulf %288, %289 : vector<1x64xf32>
    %291 = arith.addf %287, %290 : vector<1x64xf32>
    %292 = vector.broadcast %291 : vector<1x64xf32> to vector<16x64xf32>
    %293 = arith.mulf %175, %292 : vector<16x64xf32>
    %294 = vector.broadcast %2 : f32 to vector<16x64xf32>
    %295 = arith.mulf %294, %293 : vector<16x64xf32>
    %296 = arith.addf %295, %159 : vector<16x64xf32>
    %297 = tpu.concatenate %155, %296 in 1 : vector<16x64xf32>, vector<16x64xf32> -> vector<16x128xf32>
    %c0_34 = arith.constant 0 : index
    %c0_35 = arith.constant 0 : index
    %c0_36 = arith.constant 0 : index
    %298 = vector.load %arg6[%c0_34, %c0_35, %c0_36] : memref<1x16x128xf32, #tpu.memory_space<vmem>>, vector<1x16x128xf32>
    %299 = vector.shape_cast %298 : vector<1x16x128xf32> to vector<16x128xf32>
    %300 = vector.shape_cast %297 : vector<16x128xf32> to vector<1x16x128xf32>
    tpu.vector_store %arg6[%c0_34, %c0_35, %c0_36], %300 {strides = array<i32>} : memref<1x16x128xf32, #tpu.memory_space<vmem>>, vector<1x16x128xf32>,
    return
  }
  func.func @transform_0(%arg0: i32) -> (i32, i32, i32) {
    %c0_i32 = arith.constant 0 : i32
    %c0_i32_0 = arith.constant 0 : i32
    %c0_i32_1 = arith.constant 0 : i32
    return %arg0, %c0_i32, %c0_i32_0 : i32, i32, i32
  }
  func.func @transform_1(%arg0: i32) -> (i32, i32) {
    %c0_i32 = arith.constant 0 : i32
    %c0_i32_0 = arith.constant 0 : i32
    %c0_i32_1 = arith.constant 0 : i32
    return %c0_i32, %c0_i32_0 : i32, i32
  }
  func.func @transform_2(%arg0: i32) -> (i32, i32) {
    %c0_i32 = arith.constant 0 : i32
    %c0_i32_0 = arith.constant 0 : i32
    %c0_i32_1 = arith.constant 0 : i32
    return %c0_i32, %c0_i32_0 : i32, i32
  }
  func.func @transform_3(%arg0: i32) -> (i32, i32) {
    %c0_i32 = arith.constant 0 : i32
    %c0_i32_0 = arith.constant 0 : i32
    %c0_i32_1 = arith.constant 0 : i32
    return %c0_i32, %c0_i32_0 : i32, i32
  }
  func.func @transform_4(%arg0: i32) -> i32 {
    %c0_i32 = arith.constant 0 : i32
    %c0_i32_0 = arith.constant 0 : i32
    return %c0_i32 : i32
  }
  func.func @transform_5(%arg0: i32) -> (i32, i32, i32) {
    %c0_i32 = arith.constant 0 : i32
    %c0_i32_0 = arith.constant 0 : i32
    %c0_i32_1 = arith.constant 0 : i32
    return %arg0, %c0_i32, %c0_i32_0 : i32, i32, i32
  }
}

</mosaic_0001>

<llo_original>
// kernel: tpu_custom_call.1
$region0: #{tpu_custom_call.1}
  #allocation0 [shape = 'u32[]', space=smem, size = 0x4, offset = 0x4, fixed_abs, tag = 'smem constant byte address 0x4 - core index']
  #allocation1 [shape = 'u32[144,128]{1,0:T(1,128)}', space=vmem, size = 0x12000, scoped, tag = 'internal scratch']
  %s0 = inlined_call_operand.vmem [shape: f32[1,16,128], index: 0, kind: input, shape index: {}]
  %s1 = inlined_call_operand.vmem [shape: bf16[20,16], index: 1, kind: input, shape index: {}]
  %s2 = inlined_call_operand.vmem [shape: f32[20,1], index: 2, kind: input, shape index: {}]
  %s3 = inlined_call_operand.vmem [shape: f32[18,64], index: 3, kind: input, shape index: {}]
  %s4 = inlined_call_operand.vmem [shape: f32[2], index: 4, kind: input, shape index: {}]
  %s5 = inlined_call_operand.hbm [shape: f32[1,16,128], index: 5, kind: output, shape index: {}]
  %s6 = sld [smem:[#allocation0]]
  $region34: #{tpu_custom_call.1} parent=0
    _
  %s8 = ssub.s32 1, %s6
  %s9 = scalar_select 0, %s8, %s6
  $region1: #{tpu_custom_call.1} parent=0
    #allocation2 [shape = 'u8[512]{0}', space=smem, size = 0x200, scoped, tag = 'input window, operand 4, single buffered']
    #allocation3 [shape = 's32[1]{0}', space=sflag, size = 0x4, scoped, tag = 'scoped memory for tpu_custom_call.1']
    #allocation4 [shape = 's32[1]{0}', space=sflag, size = 0x4, scoped, tag = 'scoped memory for tpu_custom_call.1']
    #allocation5 [shape = 'u8[8192]{0}', space=vmem, size = 0x2000, scoped, tag = 'output window, operand 0, single buffered']
    %10 = vsyncpa [#allocation4], 0
    %11 = vsyncpa [#allocation3], 0
    // Predicated region
    $region2: #{tpu_custom_call.1} parent=1 // pred_check
      _
    $region3: #{tpu_custom_call.1} parent=1 // pred_check_branch
      %13 = sbr.rel (0) target = $region5
    $region4: #{tpu_custom_call.1} parent=1 // pred_region
      _
    $region5: #{tpu_custom_call.1} parent=1 // pred_fallthru
      _
    // Predicated region
    $region6: #{tpu_custom_call.1} parent=1 // pred_check
      _
    $region7: #{tpu_custom_call.1} parent=1 // pred_check_branch
      %15 = sbr.rel (0) target = $region9
    $region8: #{tpu_custom_call.1} parent=1 // pred_region
      _
    $region9: #{tpu_custom_call.1} parent=1 // pred_fallthru
      _
    // Predicated region
    $region10: #{tpu_custom_call.1} parent=1 // pred_check
      _
    $region11: #{tpu_custom_call.1} parent=1 // pred_check_branch
      %17 = sbr.rel (0) target = $region13
    $region12: #{tpu_custom_call.1} parent=1 // pred_region
      _
    $region13: #{tpu_custom_call.1} parent=1 // pred_fallthru
      _
    // Predicated region
    $region14: #{tpu_custom_call.1} parent=1 // pred_check
      _
    $region15: #{tpu_custom_call.1} parent=1 // pred_check_branch
      %19 = sbr.rel (0) target = $region17
    $region16: #{tpu_custom_call.1} parent=1 // pred_region
      _
    $region17: #{tpu_custom_call.1} parent=1 // pred_fallthru
      _
    // Predicated region
    $region18: #{tpu_custom_call.1} parent=1 // pred_check
      _
    $region19: #{tpu_custom_call.1} parent=1 // pred_check_branch
      %21 = sbr.rel (0) target = $region21
    $region20: #{tpu_custom_call.1} parent=1 // pred_region
      %s23 = ssub.s32 16, 16
      %24 = vsyncadd [#allocation4], %s23
      %s26 = sshll.u32 %s4, 4
      %s27 = int_to_ptr.vmem [resolvable:$true] %s26
      %29 = dma.vmem_to_smem %s27, 16, [#allocation2], [#allocation4]
    $region21: #{tpu_custom_call.1} parent=1 // pred_fallthru
      _
    // Predicated region
    $region22: #{tpu_custom_call.1} parent=1 // pred_check
      _
    $region23: #{tpu_custom_call.1} parent=1 // pred_check_branch
      %31 = sbr.rel (0) target = $region25
    $region24: #{tpu_custom_call.1} parent=1 // pred_region
      %32 = dma.done [#allocation4], 16
    $region25: #{tpu_custom_call.1} parent=1 // pred_fallthru
      _
    %33 = sfence
    %v35 = vld [vmem:[%s0] sm:$0xff]
    %v36 = vld [vmem:[%s0 + $0x8] sm:$0xff]
    %s37 = sld [smem:[#allocation2]]
    %s38 = sld [smem:[#allocation2 + $0x1]]
    %v39 = vld [vmem:[%s3] sm:$0xff]
    %v40 = vld [vmem:[%s3 + $0x8] sm:$0xff]
    %v41 = vld [vmem:[%s3 + $0x10] sm:$0x3]
    %v42 = vld [vmem:[%s1] sm:$0xf]
    %v43 = vld [vmem:[%s1 + $0x4] sm:$0xf]
    %v44 = vld [vmem:[%s1 + $0x8] sm:$0x3]
    %v45 = vpack.c.bf16 %v36, %v35
    %v46 = vld [vmem:[%s2] sm:$0xff]
    %v47 = vld [vmem:[%s2 + $0x8] sm:$0xff]
    %v48 = vld [vmem:[%s2 + $0x10] sm:$0xf]
    %50 = vset.pattern.permute.xlu0 0
    %51 = vperm.xlu0 %50, %v46
    %v52 = vpop.permute.xlu0 %51
    %55 = vset.pattern.permute.xlu0 0
    %56 = vperm.xlu0 %55, %v47
    %v57 = vpop.permute.xlu0 %56
    %60 = vset.pattern.permute.xlu0 0
    %61 = vperm.xlu0 %60, %v48
    %v62 = vpop.permute.xlu0 %61
    %v67 = vunpack.c.l.b16 %v42
    %v68 = vunpack.c.l.b16 %v43
    %v69 = vunpack.c.l.b16 %v44
    %v70 = vpack.c.b16 %v68, %v67
    %v71 = vpack.c.b16 %v69, %v69
    %vm72 = vcmask 130048
    %v74 = vsel %vm72, %v70, 0
    %v77 = vsel %vm72, %v71, 0
    %79 = vmatprep.subr.bf16.mxu0 0
    %80 = vmatpush1.bf16.msra.mxu0 %v45
    %81 = vmatprep.subr.bf16.mxu0 0
    %82 = vmatpush1.bf16.msra.mxu0 0
    %83 = vmatprep.subr.bf16.mxu0 0
    %84 = vmatpush1.bf16.msra.mxu0 0
    %85 = vmatprep.subr.bf16.mxu0 0
    %86 = vmatpush1.bf16.msra.mxu0 0
    %87 = vmatprep.subr.bf16.mxu0 0
    %88 = vmatpush1.bf16.msra.mxu0 0
    %89 = vmatprep.subr.bf16.mxu0 0
    %90 = vmatpush1.bf16.msra.mxu0 0
    %91 = vmatprep.subr.bf16.mxu0 0
    %92 = vmatpush1.bf16.msra.mxu0 0
    %93 = vmatprep.subr.bf16.mxu0 0
    %94 = vmatpush1.bf16.msra.mxu0 0
    %95 = vmatprep.subr.bf16.mxu0 0
    %96 = vmatpush1.bf16.msra.mxu0 0
    %97 = vmatprep.subr.bf16.mxu0 0
    %98 = vmatpush1.bf16.msra.mxu0 0
    %99 = vmatprep.subr.bf16.mxu0 0
    %100 = vmatpush1.bf16.msra.mxu0 0
    %101 = vmatprep.subr.bf16.mxu0 0
    %102 = vmatpush1.bf16.msra.mxu0 0
    %103 = vmatprep.subr.bf16.mxu0 0
    %104 = vmatpush1.bf16.msra.mxu0 0
    %105 = vmatprep.subr.bf16.mxu0 0
    %106 = vmatpush1.bf16.msra.mxu0 0
    %107 = vmatprep.subr.bf16.mxu0 0
    %108 = vmatpush1.bf16.msra.mxu0 0
    %109 = vmatprep.subr.bf16.mxu0 0
    %110 = vmatpush1.bf16.msra.mxu0 0
    %111 = vmatprep.mubr.bf16.mxu0 0
    %112 = vmatmul.mubr.bf16.gmra.mrb[0].mxu0 %v74
    %v113 = vpop.f32.mrb[0].mxu0
    %v114 = vadd.f32 %v52, %v113
    %v115 = vpop.f32.mrb[0].mxu0
    %v116 = vpop.f32.mrb[0].mxu0
    %v117 = vadd.f32 %v57, %v116
    %v118 = vpop.f32.mrb[0].mxu0
    %119 = vmatprep.mubr.bf16.mxu0 0
    %120 = vmatmul.mubr.bf16.gmra.mrb[0].mxu0 %v77
    %v121 = vpop.f32.mrb[0].mxu0
    %v122 = vadd.f32 %v62, %v121
    %v123 = vpop.f32.mrb[0].mxu0
    %v124 = vpop.f32.mrb[0].mxu0
    %v125 = vpop.f32.mrb[0].mxu0
    %126 = vdwg.mxu0
    %v127 = vpack.c.bf16 %v122, %v122
    %128 = vxpose.xlu0.c.b16.start [1/8] %v127, 128
    %129 = vxpose.xlu0.c.b16.cont [2/8] 0, 128
    %130 = vxpose.xlu0.c.b16.cont [3/8] 0, 128
    %131 = vxpose.xlu0.c.b16.cont [4/8] 0, 128
    %132 = vxpose.xlu0.c.b16.cont [5/8] 0, 128
    %133 = vxpose.xlu0.c.b16.cont [6/8] 0, 128
    %134 = vxpose.xlu0.c.b16.cont [7/8] 0, 128
    %135 = vxpose.xlu0.c.b16.end [8/8] 0, 128
    %v136 = vpop.trf.xlu0
    %v137 = vpop.trf.xlu0
    %v138 = vpop.trf.xlu0
    %v139 = vpop.trf.xlu0
    %v140 = vpop.trf.xlu0
    %v141 = vpop.trf.xlu0
    %v142 = vpop.trf.xlu0
    %v143 = vpop.trf.xlu0
    %v145 = vrot.slane %v127, 1
    %vm146 = vcmask 15360
    %v148 = vsel %vm146, %v136, 0
    %v151 = vsel %vm146, %v137, 0
    %v154 = vsel %vm146, %v138, 0
    %v157 = vsel %vm146, %v139, 0
    %vm159 = vcmask 1040384
    %v161 = vsel %vm159, %v145, 0
    %163 = vmatprep.subr.bf16.mxu0 0
    %164 = vmatpush1.bf16.msra.mxu0 %v161
    %165 = vmatprep.subr.bf16.mxu0 0
    %166 = vmatpush1.bf16.msra.mxu0 0
    %167 = vmatprep.subr.bf16.mxu0 0
    %168 = vmatpush1.bf16.msra.mxu0 0
    %169 = vmatprep.subr.bf16.mxu0 0
    %170 = vmatpush1.bf16.msra.mxu0 0
    %171 = vmatprep.subr.bf16.mxu0 0
    %172 = vmatpush1.bf16.msra.mxu0 0
    %173 = vmatprep.subr.bf16.mxu0 0
    %174 = vmatpush1.bf16.msra.mxu0 0
    %175 = vmatprep.subr.bf16.mxu0 0
    %176 = vmatpush1.bf16.msra.mxu0 0
    %177 = vmatprep.subr.bf16.mxu0 0
    %178 = vmatpush1.bf16.msra.mxu0 0
    %179 = vmatprep.subr.bf16.mxu0 0
    %180 = vmatpush1.bf16.msra.mxu0 0
    %181 = vmatprep.subr.bf16.mxu0 0
    %182 = vmatpush1.bf16.msra.mxu0 0
    %183 = vmatprep.subr.bf16.mxu0 0
    %184 = vmatpush1.bf16.msra.mxu0 0
    %185 = vmatprep.subr.bf16.mxu0 0
    %186 = vmatpush1.bf16.msra.mxu0 0
    %187 = vmatprep.subr.bf16.mxu0 0
    %188 = vmatpush1.bf16.msra.mxu0 0
    %189 = vmatprep.subr.bf16.mxu0 0
    %190 = vmatpush1.bf16.msra.mxu0 0
    %191 = vmatprep.subr.bf16.mxu0 0
    %192 = vmatpush1.bf16.msra.mxu0 0
    %193 = vmatprep.subr.bf16.mxu0 0
    %194 = vmatpush1.bf16.msra.mxu0 0
    %195 = vmatprep.mubr.bf16.mxu0 0
    %196 = vmatmul.mubr.bf16.gmra.mrb[0].mxu0 %v148
    %v197 = vpop.f32.mrb[0].mxu0
    %v198 = vadd.f32 0.0, %v197
    %v199 = vpop.f32.mrb[0].mxu0
    %v200 = vpop.f32.mrb[0].mxu0
    %v201 = vadd.f32 0.0, %v200
    %v202 = vpop.f32.mrb[0].mxu0
    %203 = vmatprep.mubr.bf16.mxu0 0
    %204 = vmatmul.mubr.bf16.gmra.mrb[0].mxu0 %v151
    %v205 = vpop.f32.mrb[0].mxu0
    %v206 = vadd.f32 0.0, %v205
    %v207 = vpop.f32.mrb[0].mxu0
    %v208 = vpop.f32.mrb[0].mxu0
    %v209 = vadd.f32 0.0, %v208
    %v210 = vpop.f32.mrb[0].mxu0
    %211 = vmatprep.mubr.bf16.mxu0 0
    %212 = vmatmul.mubr.bf16.gmra.mrb[0].mxu0 %v154
    %v213 = vpop.f32.mrb[0].mxu0
    %v214 = vadd.f32 0.0, %v213
    %v215 = vpop.f32.mrb[0].mxu0
    %v216 = vpop.f32.mrb[0].mxu0
    %v217 = vadd.f32 0.0, %v216
    %v218 = vpop.f32.mrb[0].mxu0
    %219 = vmatprep.mubr.bf16.mxu0 0
    %220 = vmatmul.mubr.bf16.gmra.mrb[0].mxu0 %v157
    %v221 = vpop.f32.mrb[0].mxu0
    %v222 = vadd.f32 0.0, %v221
    %v223 = vpop.f32.mrb[0].mxu0
    %v224 = vpop.f32.mrb[0].mxu0
    %v225 = vadd.f32 0.0, %v224
    %v226 = vpop.f32.mrb[0].mxu0
    %227 = vdwg.mxu0
    %vm228 = vcmask 523264
    %v229 = vsel %vm228, %v198, -inf
    %230 = vmax.xlane.f32.xlu0 %v229
    %v231 = vpop.xlane.xlu0 %230
    %v232 = vsel %vm228, %v201, -inf
    %233 = vmax.xlane.f32.xlu0 %v232
    %v234 = vpop.xlane.xlu0 %233
    %v235 = vsel %vm228, %v206, -inf
    %236 = vmax.xlane.f32.xlu0 %v235
    %v237 = vpop.xlane.xlu0 %236
    %v238 = vsel %vm228, %v209, -inf
    %239 = vmax.xlane.f32.xlu0 %v238
    %v240 = vpop.xlane.xlu0 %239
    %v241 = vsel %vm228, %v214, -inf
    %242 = vmax.xlane.f32.xlu0 %v241
    %v243 = vpop.xlane.xlu0 %242
    %v244 = vsel %vm228, %v217, -inf
    %245 = vmax.xlane.f32.xlu0 %v244
    %v246 = vpop.xlane.xlu0 %245
    %v247 = vsel %vm228, %v222, -inf
    %248 = vmax.xlane.f32.xlu0 %v247
    %v249 = vpop.xlane.xlu0 %248
    %v250 = vsel %vm228, %v225, -inf
    %251 = vmax.xlane.f32.xlu0 %v250
    %v252 = vpop.xlane.xlu0 %251
    %v253 = vsub.f32 %v198, %v231
    %v254 = vsub.f32 %v201, %v234
    %v255 = vsub.f32 %v206, %v237
    %v256 = vsub.f32 %v209, %v240
    %v257 = vsub.f32 %v214, %v243
    %v258 = vsub.f32 %v217, %v246
    %v259 = vsub.f32 %v222, %v249
    %v260 = vsub.f32 %v225, %v252
    %v261 = vmul.f32 %v253, 1.442695
    %v262 = vpow.pop %v261
    %v263 = vmul.f32 %v254, 1.442695
    %v264 = vpow.pop %v263
    %v265 = vmul.f32 %v255, 1.442695
    %v266 = vpow.pop %v265
    %v267 = vmul.f32 %v256, 1.442695
    %v268 = vpow.pop %v267
    %v269 = vmul.f32 %v257, 1.442695
    %v270 = vpow.pop %v269
    %v271 = vmul.f32 %v258, 1.442695
    %v272 = vpow.pop %v271
    %v273 = vmul.f32 %v259, 1.442695
    %v274 = vpow.pop %v273
    %v275 = vmul.f32 %v260, 1.442695
    %v276 = vpow.pop %v275
    %v277 = vsel %vm228, %v262, 0.0
    %278 = vadd.xlane.f32.xlu0 %v277
    %v279 = vpop.xlane.xlu0 %278
    %v280 = vsel %vm228, %v264, 0.0
    %281 = vadd.xlane.f32.xlu0 %v280
    %v282 = vpop.xlane.xlu0 %281
    %v283 = vsel %vm228, %v266, 0.0
    %284 = vadd.xlane.f32.xlu0 %v283
    %v285 = vpop.xlane.xlu0 %284
    %v286 = vsel %vm228, %v268, 0.0
    %287 = vadd.xlane.f32.xlu0 %v286
    %v288 = vpop.xlane.xlu0 %287
    %v289 = vsel %vm228, %v270, 0.0
    %290 = vadd.xlane.f32.xlu0 %v289
    %v291 = vpop.xlane.xlu0 %290
    %v292 = vsel %vm228, %v272, 0.0
    %293 = vadd.xlane.f32.xlu0 %v292
    %v294 = vpop.xlane.xlu0 %293
    %v295 = vsel %vm228, %v274, 0.0
    %296 = vadd.xlane.f32.xlu0 %v295
    %v297 = vpop.xlane.xlu0 %296
    %v298 = vsel %vm228, %v276, 0.0
    %299 = vadd.xlane.f32.xlu0 %v298
    %v300 = vpop.xlane.xlu0 %299
    %v301 = vrcp.pop %v279
    %v302 = vrcp.pop %v282
    %v303 = vrcp.pop %v285
    %v304 = vrcp.pop %v288
    %v305 = vrcp.pop %v291
    %v306 = vrcp.pop %v294
    %v307 = vrcp.pop %v297
    %v308 = vrcp.pop %v300
    %v309 = vmul.f32 %v262, %v301
    %v310 = vmul.f32 %v264, %v302
    %v311 = vmul.f32 %v266, %v303
    %v312 = vmul.f32 %v268, %v304
    %v313 = vmul.f32 %v270, %v305
    %v314 = vmul.f32 %v272, %v306
    %v315 = vmul.f32 %v274, %v307
    %v316 = vmul.f32 %v276, %v308
    %v317 = vpack.c.bf16 %v117, %v114
    %v318 = vpack.c.bf16 %v310, %v309
    %v319 = vpack.c.bf16 %v312, %v311
    %v320 = vpack.c.bf16 %v314, %v313
    %v321 = vpack.c.bf16 %v316, %v315
    %v323 = vsel %vm228, %v317, 0
    %v326 = vsel %vm228, %v318, 0
    %v329 = vsel %vm228, %v319, 0
    %v332 = vsel %vm228, %v320, 0
    %v335 = vsel %vm228, %v321, 0
    %337 = vmatprep.subr.bf16.mxu0 0
    %338 = vmatpush1.bf16.xpose.msra.mxu0 %v326
    %339 = vmatprep.subr.bf16.mxu0 0
    %340 = vmatpush1.bf16.xpose.msra.mxu0 %v329
    %341 = vmatprep.subr.bf16.mxu0 0
    %342 = vmatpush1.bf16.xpose.msra.mxu0 %v332
    %343 = vmatprep.subr.bf16.mxu0 0
    %344 = vmatpush1.bf16.xpose.msra.mxu0 %v335
    %345 = vmatprep.subr.bf16.mxu0 0
    %346 = vmatpush1.bf16.xpose.msra.mxu0 0
    %347 = vmatprep.subr.bf16.mxu0 0
    %348 = vmatpush1.bf16.xpose.msra.mxu0 0
    %349 = vmatprep.subr.bf16.mxu0 0
    %350 = vmatpush1.bf16.xpose.msra.mxu0 0
    %351 = vmatprep.subr.bf16.mxu0 0
    %352 = vmatpush1.bf16.xpose.msra.mxu0 0
    %353 = vmatprep.subr.bf16.mxu0 0
    %354 = vmatpush1.bf16.xpose.msra.mxu0 0
    %355 = vmatprep.subr.bf16.mxu0 0
    %356 = vmatpush1.bf16.xpose.msra.mxu0 0
    %357 = vmatprep.subr.bf16.mxu0 0
    %358 = vmatpush1.bf16.xpose.msra.mxu0 0
    %359 = vmatprep.subr.bf16.mxu0 0
    %360 = vmatpush1.bf16.xpose.msra.mxu0 0
    %361 = vmatprep.subr.bf16.mxu0 0
    %362 = vmatpush1.bf16.xpose.msra.mxu0 0
    %363 = vmatprep.subr.bf16.mxu0 0
    %364 = vmatpush1.bf16.xpose.msra.mxu0 0
    %365 = vmatprep.subr.bf16.mxu0 0
    %366 = vmatpush1.bf16.xpose.msra.mxu0 0
    %367 = vmatprep.subr.bf16.mxu0 0
    %368 = vmatpush1.bf16.xpose.msra.mxu0 0
    %369 = vmatprep.mubr.bf16.mxu0 0
    %370 = vmatmul.mubr.bf16.gmra.mrb[0].mxu0 %v323
    %v371 = vpop.f32.mrb[0].mxu0
    %v372 = vadd.f32 0.0, %v371
    %v373 = vpop.f32.mrb[0].mxu0
    %v374 = vpop.f32.mrb[0].mxu0
    %v375 = vadd.f32 0.0, %v374
    %v376 = vpop.f32.mrb[0].mxu0
    %377 = vdwg.mxu0
    %v379 = vsel %vm228, 1.0, 0
    %v382 = vsel %vm228, %v309, 0
    %v385 = vsel %vm228, %v310, 0
    %v388 = vsel %vm228, %v311, 0
    %v391 = vsel %vm228, %v312, 0
    %v394 = vsel %vm228, %v313, 0
    %v397 = vsel %vm228, %v314, 0
    %v400 = vsel %vm228, %v315, 0
    %v403 = vsel %vm228, %v316, 0
    %405 = vmatprep.subr.mxu0 0.0
    %406 = vmatpush1.xpose.msra.mxu0 %v382
    %407 = vmatprep.subr.mxu0 0.0
    %408 = vmatpush1.xpose.msra.mxu0 %v385
    %409 = vmatprep.subr.mxu0 0.0
    %410 = vmatpush1.xpose.msra.mxu0 %v388
    %411 = vmatprep.subr.mxu0 0.0
    %412 = vmatpush1.xpose.msra.mxu0 %v391
    %413 = vmatprep.subr.mxu0 0.0
    %414 = vmatpush1.xpose.msra.mxu0 %v394
    %415 = vmatprep.subr.mxu0 0.0
    %416 = vmatpush1.xpose.msra.mxu0 %v397
    %417 = vmatprep.subr.mxu0 0.0
    %418 = vmatpush1.xpose.msra.mxu0 %v400
    %419 = vmatprep.subr.mxu0 0.0
    %420 = vmatpush1.xpose.msra.mxu0 %v403
    %421 = vmatprep.subr.mxu0 0.0
    %422 = vmatpush1.xpose.msra.mxu0 0.0
    %423 = vmatprep.subr.mxu0 0.0
    %424 = vmatpush1.xpose.msra.mxu0 0.0
    %425 = vmatprep.subr.mxu0 0.0
    %426 = vmatpush1.xpose.msra.mxu0 0.0
    %427 = vmatprep.subr.mxu0 0.0
    %428 = vmatpush1.xpose.msra.mxu0 0.0
    %429 = vmatprep.subr.mxu0 0.0
    %430 = vmatpush1.xpose.msra.mxu0 0.0
    %431 = vmatprep.subr.mxu0 0.0
    %432 = vmatpush1.xpose.msra.mxu0 0.0
    %433 = vmatprep.subr.mxu0 0.0
    %434 = vmatpush1.xpose.msra.mxu0 0.0
    %435 = vmatprep.subr.mxu0 0.0
    %436 = vmatpush1.xpose.msra.mxu0 0.0
    %437 = vmatprep.subr.mxu0 0.0
    %438 = vmatpush1.xpose.msra.mxu0 0.0
    %439 = vmatprep.subr.mxu0 0.0
    %440 = vmatpush1.xpose.msra.mxu0 0.0
    %441 = vmatprep.subr.mxu0 0.0
    %442 = vmatpush1.xpose.msra.mxu0 0.0
    %443 = vmatprep.subr.mxu0 0.0
    %444 = vmatpush1.xpose.msra.mxu0 0.0
    %445 = vmatprep.subr.mxu0 0.0
    %446 = vmatpush1.xpose.msra.mxu0 0.0
    %447 = vmatprep.subr.mxu0 0.0
    %448 = vmatpush1.xpose.msra.mxu0 0.0
    %449 = vmatprep.subr.mxu0 0.0
    %450 = vmatpush1.xpose.msra.mxu0 0.0
    %451 = vmatprep.subr.mxu0 0.0
    %452 = vmatpush1.xpose.msra.mxu0 0.0
    %453 = vmatprep.subr.mxu0 0.0
    %454 = vmatpush1.xpose.msra.mxu0 0.0
    %455 = vmatprep.subr.mxu0 0.0
    %456 = vmatpush1.xpose.msra.mxu0 0.0
    %457 = vmatprep.subr.mxu0 0.0
    %458 = vmatpush1.xpose.msra.mxu0 0.0
    %459 = vmatprep.subr.mxu0 0.0
    %460 = vmatpush1.xpose.msra.mxu0 0.0
    %461 = vmatprep.subr.mxu0 0.0
    %462 = vmatpush1.xpose.msra.mxu0 0.0
    %463 = vmatprep.subr.mxu0 0.0
    %464 = vmatpush1.xpose.msra.mxu0 0.0
    %465 = vmatprep.subr.mxu0 0.0
    %466 = vmatpush1.xpose.msra.mxu0 0.0
    %467 = vmatprep.subr.mxu0 0.0
    %468 = vmatpush1.xpose.msra.mxu0 0.0
    %469 = vmatprep.mubr.f32.mxu0 0.0
    %470 = vmatmul.mubr.f32.gmra.mrb[0].mxu0 %v379
    %v471 = vpop.f32.mrb[0].mxu0
    %v472 = vadd.f32 0.0, %v471
    %v473 = vpop.f32.mrb[0].mxu0
    %474 = vdwg.mxu0
    %v475 = vmul.f32 %v309, %v309
    %v476 = vmul.f32 %v310, %v310
    %v477 = vmul.f32 %v311, %v311
    %v478 = vmul.f32 %v312, %v312
    %v479 = vmul.f32 %v313, %v313
    %v480 = vmul.f32 %v314, %v314
    %v481 = vmul.f32 %v315, %v315
    %v482 = vmul.f32 %v316, %v316
    %v484 = vsel %vm228, %v475, 0
    %v487 = vsel %vm228, %v476, 0
    %v490 = vsel %vm228, %v477, 0
    %v493 = vsel %vm228, %v478, 0
    %v496 = vsel %vm228, %v479, 0
    %v499 = vsel %vm228, %v480, 0
    %v502 = vsel %vm228, %v481, 0
    %v505 = vsel %vm228, %v482, 0
    %507 = vmatprep.subr.mxu0 0.0
    %508 = vmatpush1.xpose.msra.mxu0 %v484
    %509 = vmatprep.subr.mxu0 0.0
    %510 = vmatpush1.xpose.msra.mxu0 %v487
    %511 = vmatprep.subr.mxu0 0.0
    %512 = vmatpush1.xpose.msra.mxu0 %v490
    %513 = vmatprep.subr.mxu0 0.0
    %514 = vmatpush1.xpose.msra.mxu0 %v493
    %515 = vmatprep.subr.mxu0 0.0
    %516 = vmatpush1.xpose.msra.mxu0 %v496
    %517 = vmatprep.subr.mxu0 0.0
    %518 = vmatpush1.xpose.msra.mxu0 %v499
    %519 = vmatprep.subr.mxu0 0.0
    %520 = vmatpush1.xpose.msra.mxu0 %v502
    %521 = vmatprep.subr.mxu0 0.0
    %522 = vmatpush1.xpose.msra.mxu0 %v505
    %523 = vmatprep.subr.mxu0 0.0
    %524 = vmatpush1.xpose.msra.mxu0 0.0
    %525 = vmatprep.subr.mxu0 0.0
    %526 = vmatpush1.xpose.msra.mxu0 0.0
    %527 = vmatprep.subr.mxu0 0.0
    %528 = vmatpush1.xpose.msra.mxu0 0.0
    %529 = vmatprep.subr.mxu0 0.0
    %530 = vmatpush1.xpose.msra.mxu0 0.0
    %531 = vmatprep.subr.mxu0 0.0
    %532 = vmatpush1.xpose.msra.mxu0 0.0
    %533 = vmatprep.subr.mxu0 0.0
    %534 = vmatpush1.xpose.msra.mxu0 0.0
    %535 = vmatprep.subr.mxu0 0.0
    %536 = vmatpush1.xpose.msra.mxu0 0.0
    %537 = vmatprep.subr.mxu0 0.0
    %538 = vmatpush1.xpose.msra.mxu0 0.0
    %539 = vmatprep.subr.mxu0 0.0
    %540 = vmatpush1.xpose.msra.mxu0 0.0
    %541 = vmatprep.subr.mxu0 0.0
    %542 = vmatpush1.xpose.msra.mxu0 0.0
    %543 = vmatprep.subr.mxu0 0.0
    %544 = vmatpush1.xpose.msra.mxu0 0.0
    %545 = vmatprep.subr.mxu0 0.0
    %546 = vmatpush1.xpose.msra.mxu0 0.0
    %547 = vmatprep.subr.mxu0 0.0
    %548 = vmatpush1.xpose.msra.mxu0 0.0
    %549 = vmatprep.subr.mxu0 0.0
    %550 = vmatpush1.xpose.msra.mxu0 0.0
    %551 = vmatprep.subr.mxu0 0.0
    %552 = vmatpush1.xpose.msra.mxu0 0.0
    %553 = vmatprep.subr.mxu0 0.0
    %554 = vmatpush1.xpose.msra.mxu0 0.0
    %555 = vmatprep.subr.mxu0 0.0
    %556 = vmatpush1.xpose.msra.mxu0 0.0
    %557 = vmatprep.subr.mxu0 0.0
    %558 = vmatpush1.xpose.msra.mxu0 0.0
    %559 = vmatprep.subr.mxu0 0.0
    %560 = vmatpush1.xpose.msra.mxu0 0.0
    %561 = vmatprep.subr.mxu0 0.0
    %562 = vmatpush1.xpose.msra.mxu0 0.0
    %563 = vmatprep.subr.mxu0 0.0
    %564 = vmatpush1.xpose.msra.mxu0 0.0
    %565 = vmatprep.subr.mxu0 0.0
    %566 = vmatpush1.xpose.msra.mxu0 0.0
    %567 = vmatprep.subr.mxu0 0.0
    %568 = vmatpush1.xpose.msra.mxu0 0.0
    %569 = vmatprep.subr.mxu0 0.0
    %570 = vmatpush1.xpose.msra.mxu0 0.0
    %571 = vmatprep.mubr.f32.mxu0 0.0
    %572 = vmatmul.mubr.f32.gmra.mrb[0].mxu0 %v379
    %v573 = vpop.f32.mrb[0].mxu0
    %v574 = vadd.f32 0.0, %v573
    %v575 = vpop.f32.mrb[0].mxu0
    %576 = vdwg.mxu0
    %v577 = vmul.f32 %v472, 0.015625
    %v578 = vmul.f32 %v472, %v577
    %v579 = vsub.f32 %v574, %v578
    %v580 = vmax.f32 %v579, 0.0
    %v581 = vmul.f32 %v580, 0.015873017
    %v582 = vrsqrt.pop %v581
    %v583 = vmul.f32 %v581, %v582
    %vm584 = vcmp.eq.f32.partialorder %v581, inf
    %v585 = vsel %vm584, %v581, %v583
    %vm586 = vcmp.eq.f32.partialorder %v581, 0.0
    %v587 = vand.u32 %v581, 2147483648
    %v588 = vsel %vm586, %v587, %v585
    %v589 = vsel %vm228, %v114, 0.0
    %v590 = vsel %vm228, %v117, 0.0
    %v591 = vadd.f32 %v589, %v590
    %v592 = vrot.slane %v591, 4
    %v593 = vadd.f32 %v591, %v592
    %v594 = vrot.slane %v593, 2
    %v595 = vadd.f32 %v593, %v594
    %v596 = vrot.slane %v595, 1
    %v597 = vadd.f32 %v595, %v596
    %v598 = vrcp.pop 16.0
    %v599 = vmul.f32 %v597, %v598
    %v600 = vstv %s38
    %v601 = vmul.f32 %v588, %v600
    %v602 = vsel %vm159, %v601, %v599
    %604 = vrot.lane.b32.xlu0 %v602, 73
    %v605 = vpop.permute.xlu0 %604
    %607 = vrot.lane.b32.xlu0 %v602, 9
    %v608 = vpop.permute.xlu0 %607
    %vm610 = vcmask 72704
    %v611 = vsel %vm610, %v605, %v608
    %v612 = vmul.f32 %v39, %v611
    %v613 = vadd.f32 %v612, 0.0
    %v614 = vmul.f32 %v40, %v611
    %v616 = vrot.slane %v614, 1
    %v618 = vadd.f32 %v613, %v616
    %619 = vrot.lane.b32.xlu0 %v602, 72
    %v620 = vpop.permute.xlu0 %619
    %622 = vrot.lane.b32.xlu0 %v602, 8
    %v623 = vpop.permute.xlu0 %622
    %vm625 = vcmask 64512
    %v626 = vsel %vm625, %v620, %v623
    %v628 = vrot.slane %v626, 7
    %v630 = vmul.f32 %v39, %v628
    %v632 = vrot.slane %v630, 1
    %v634 = vadd.f32 %v618, %v632
    %v635 = vmul.f32 %v40, %v628
    %v637 = vrot.slane %v635, 2
    %v639 = vadd.f32 %v634, %v637
    %640 = vrot.lane.b32.xlu0 %v602, 71
    %v641 = vpop.permute.xlu0 %640
    %643 = vrot.lane.b32.xlu0 %v602, 7
    %v644 = vpop.permute.xlu0 %643
    %vm646 = vcmask 56320
    %v647 = vsel %vm646, %v641, %v644
    %v649 = vrot.slane %v647, 6
    %v651 = vmul.f32 %v39, %v649
    %v653 = vrot.slane %v651, 2
    %v655 = vadd.f32 %v639, %v653
    %v656 = vmul.f32 %v40, %v649
    %v658 = vrot.slane %v656, 3
    %v660 = vadd.f32 %v655, %v658
    %661 = vrot.lane.b32.xlu0 %v602, 65
    %v662 = vpop.permute.xlu0 %661
    %664 = vrot.lane.b32.xlu0 %v602, 1
    %v665 = vpop.permute.xlu0 %664
    %vm667 = vcmask 7168
    %v668 = vsel %vm667, %v662, %v665
    %v670 = vrot.slane %v668, 5
    %v672 = vmul.f32 %v39, %v670
    %v674 = vrot.slane %v672, 3
    %v676 = vadd.f32 %v660, %v674
    %v677 = vmul.f32 %v40, %v670
    %v679 = vrot.slane %v677, 4
    %v681 = vadd.f32 %v676, %v679
    %v682 = vrot.slane %v602, 4
    %v684 = vmul.f32 %v39, %v682
    %v686 = vrot.slane %v684, 4
    %v688 = vadd.f32 %v681, %v686
    %v689 = vmul.f32 %v40, %v682
    %v691 = vrot.slane %v689, 5
    %v693 = vadd.f32 %v688, %v691
    %694 = vrot.lane.b32.xlu0 %v602, 127
    %v695 = vpop.permute.xlu0 %694
    %697 = vrot.lane.b32.xlu0 %v602, 63
    %v698 = vpop.permute.xlu0 %697
    %vm700 = vcmask 515072
    %v701 = vsel %vm700, %v695, %v698
    %v703 = vrot.slane %v701, 3
    %v705 = vmul.f32 %v39, %v703
    %v707 = vrot.slane %v705, 5
    %v709 = vadd.f32 %v693, %v707
    %v710 = vmul.f32 %v40, %v703
    %v712 = vrot.slane %v710, 6
    %v714 = vadd.f32 %v709, %v712
    %715 = vrot.lane.b32.xlu0 %v602, 121
    %v716 = vpop.permute.xlu0 %715
    %718 = vrot.lane.b32.xlu0 %v602, 57
    %v719 = vpop.permute.xlu0 %718
    %vm721 = vcmask 465920
    %v722 = vsel %vm721, %v716, %v719
    %v724 = vrot.slane %v722, 2
    %v726 = vmul.f32 %v39, %v724
    %v728 = vrot.slane %v726, 6
    %v730 = vadd.f32 %v714, %v728
    %v731 = vmul.f32 %v40, %v724
    %v733 = vrot.slane %v731, 7
    %v735 = vadd.f32 %v730, %v733
    %736 = vrot.lane.b32.xlu0 %v602, 120
    %v737 = vpop.permute.xlu0 %736
    %739 = vrot.lane.b32.xlu0 %v602, 56
    %v740 = vpop.permute.xlu0 %739
    %vm742 = vcmask 457728
    %v743 = vsel %vm742, %v737, %v740
    %v745 = vrot.slane %v743, 1
    %v747 = vmul.f32 %v39, %v745
    %v749 = vrot.slane %v747, 7
    %v751 = vadd.f32 %v735, %v749
    %v752 = vmul.f32 %v41, %v745
    %v753 = vadd.f32 %v751, %v752
    %754 = vrot.lane.b32.xlu0 %v602, 119
    %v755 = vpop.permute.xlu0 %754
    %757 = vrot.lane.b32.xlu0 %v602, 55
    %v758 = vpop.permute.xlu0 %757
    %vm760 = vcmask 449536
    %v761 = vsel %vm760, %v755, %v758
    %v762 = vmul.f32 %v40, %v761
    %v763 = vadd.f32 %v753, %v762
    %v764 = vmul.f32 %v41, %v761
    %v766 = vrot.slane %v764, 1
    %v768 = vadd.f32 %v763, %v766
    %v769 = vlaneseq
    %v770 = vshrl.u32 %v769, 7
    %v771 = vsub.s32 0, %v770
    %v772 = vrot.slane %v768, %v771
    %v773 = vmul.f32 %v372, %v772
    %v774 = vmul.f32 %v375, %v772
    %v775 = vstv %s37
    %v776 = vmul.f32 %v775, %v773
    %v777 = vmul.f32 %v775, %v774
    %v778 = vadd.f32 %v776, %v35
    %v779 = vadd.f32 %v777, %v36
    %780 = vrot.lane.b32.xlu0 %v127, 64
    %v781 = vpop.permute.xlu0 %780
    %783 = vxpose.xlu0.c.b16.start [1/8] %v781, 128
    %784 = vxpose.xlu0.c.b16.cont [2/8] 0, 128
    %785 = vxpose.xlu0.c.b16.cont [3/8] 0, 128
    %786 = vxpose.xlu0.c.b16.cont [4/8] 0, 128
    %787 = vxpose.xlu0.c.b16.cont [5/8] 0, 128
    %788 = vxpose.xlu0.c.b16.cont [6/8] 0, 128
    %789 = vxpose.xlu0.c.b16.cont [7/8] 0, 128
    %790 = vxpose.xlu0.c.b16.end [8/8] 0, 128
    %v791 = vpop.trf.xlu0
    %v792 = vpop.trf.xlu0
    %v793 = vpop.trf.xlu0
    %v794 = vpop.trf.xlu0
    %v795 = vpop.trf.xlu0
    %v796 = vpop.trf.xlu0
    %v797 = vpop.trf.xlu0
    %v798 = vpop.trf.xlu0
    %799 = vrot.lane.b32.xlu0 %v145, 64
    %v800 = vpop.permute.xlu0 %799
    %v802 = vsel %vm146, %v791, 0
    %v805 = vsel %vm146, %v792, 0
    %v808 = vsel %vm146, %v793, 0
    %v811 = vsel %vm146, %v794, 0
    %v814 = vsel %vm159, %v800, 0
    %816 = vmatprep.subr.bf16.mxu0 0
    %817 = vmatpush1.bf16.msra.mxu0 %v814
    %818 = vmatprep.subr.bf16.mxu0 0
    %819 = vmatpush1.bf16.msra.mxu0 0
    %820 = vmatprep.subr.bf16.mxu0 0
    %821 = vmatpush1.bf16.msra.mxu0 0
    %822 = vmatprep.subr.bf16.mxu0 0
    %823 = vmatpush1.bf16.msra.mxu0 0
    %824 = vmatprep.subr.bf16.mxu0 0
    %825 = vmatpush1.bf16.msra.mxu0 0
    %826 = vmatprep.subr.bf16.mxu0 0
    %827 = vmatpush1.bf16.msra.mxu0 0
    %828 = vmatprep.subr.bf16.mxu0 0
    %829 = vmatpush1.bf16.msra.mxu0 0
    %830 = vmatprep.subr.bf16.mxu0 0
    %831 = vmatpush1.bf16.msra.mxu0 0
    %832 = vmatprep.subr.bf16.mxu0 0
    %833 = vmatpush1.bf16.msra.mxu0 0
    %834 = vmatprep.subr.bf16.mxu0 0
    %835 = vmatpush1.bf16.msra.mxu0 0
    %836 = vmatprep.subr.bf16.mxu0 0
    %837 = vmatpush1.bf16.msra.mxu0 0
    %838 = vmatprep.subr.bf16.mxu0 0
    %839 = vmatpush1.bf16.msra.mxu0 0
    %840 = vmatprep.subr.bf16.mxu0 0
    %841 = vmatpush1.bf16.msra.mxu0 0
    %842 = vmatprep.subr.bf16.mxu0 0
    %843 = vmatpush1.bf16.msra.mxu0 0
    %844 = vmatprep.subr.bf16.mxu0 0
    %845 = vmatpush1.bf16.msra.mxu0 0
    %846 = vmatprep.subr.bf16.mxu0 0
    %847 = vmatpush1.bf16.msra.mxu0 0
    %848 = vmatprep.mubr.bf16.mxu0 0
    %849 = vmatmul.mubr.bf16.gmra.mrb[0].mxu0 %v802
    %v850 = vpop.f32.mrb[0].mxu0
    %v851 = vadd.f32 0.0, %v850
    %v852 = vpop.f32.mrb[0].mxu0
    %v853 = vpop.f32.mrb[0].mxu0
    %v854 = vadd.f32 0.0, %v853
    %v855 = vpop.f32.mrb[0].mxu0
    %856 = vmatprep.mubr.bf16.mxu0 0
    %857 = vmatmul.mubr.bf16.gmra.mrb[0].mxu0 %v805
    %v858 = vpop.f32.mrb[0].mxu0
    %v859 = vadd.f32 0.0, %v858
    %v860 = vpop.f32.mrb[0].mxu0
    %v861 = vpop.f32.mrb[0].mxu0
    %v862 = vadd.f32 0.0, %v861
    %v863 = vpop.f32.mrb[0].mxu0
    %864 = vmatprep.mubr.bf16.mxu0 0
    %865 = vmatmul.mubr.bf16.gmra.mrb[0].mxu0 %v808
    %v866 = vpop.f32.mrb[0].mxu0
    %v867 = vadd.f32 0.0, %v866
    %v868 = vpop.f32.mrb[0].mxu0
    %v869 = vpop.f32.mrb[0].mxu0
    %v870 = vadd.f32 0.0, %v869
    %v871 = vpop.f32.mrb[0].mxu0
    %872 = vmatprep.mubr.bf16.mxu0 0
    %873 = vmatmul.mubr.bf16.gmra.mrb[0].mxu0 %v811
    %v874 = vpop.f32.mrb[0].mxu0
    %v875 = vadd.f32 0.0, %v874
    %v876 = vpop.f32.mrb[0].mxu0
    %v877 = vpop.f32.mrb[0].mxu0
    %v878 = vadd.f32 0.0, %v877
    %v879 = vpop.f32.mrb[0].mxu0
    %880 = vdwg.mxu0
    %v881 = vsel %vm228, %v851, -inf
    %882 = vmax.xlane.f32.xlu0 %v881
    %v883 = vpop.xlane.xlu0 %882
    %v884 = vsel %vm228, %v854, -inf
    %885 = vmax.xlane.f32.xlu0 %v884
    %v886 = vpop.xlane.xlu0 %885
    %v887 = vsel %vm228, %v859, -inf
    %888 = vmax.xlane.f32.xlu0 %v887
    %v889 = vpop.xlane.xlu0 %888
    %v890 = vsel %vm228, %v862, -inf
    %891 = vmax.xlane.f32.xlu0 %v890
    %v892 = vpop.xlane.xlu0 %891
    %v893 = vsel %vm228, %v867, -inf
    %894 = vmax.xlane.f32.xlu0 %v893
    %v895 = vpop.xlane.xlu0 %894
    %v896 = vsel %vm228, %v870, -inf
    %897 = vmax.xlane.f32.xlu0 %v896
    %v898 = vpop.xlane.xlu0 %897
    %v899 = vsel %vm228, %v875, -inf
    %900 = vmax.xlane.f32.xlu0 %v899
    %v901 = vpop.xlane.xlu0 %900
    %v902 = vsel %vm228, %v878, -inf
    %903 = vmax.xlane.f32.xlu0 %v902
    %v904 = vpop.xlane.xlu0 %903
    %v905 = vsub.f32 %v851, %v883
    %v906 = vsub.f32 %v854, %v886
    %v907 = vsub.f32 %v859, %v889
    %v908 = vsub.f32 %v862, %v892
    %v909 = vsub.f32 %v867, %v895
    %v910 = vsub.f32 %v870, %v898
    %v911 = vsub.f32 %v875, %v901
    %v912 = vsub.f32 %v878, %v904
    %v913 = vmul.f32 %v905, 1.442695
    %v914 = vpow.pop %v913
    %v915 = vmul.f32 %v906, 1.442695
    %v916 = vpow.pop %v915
    %v917 = vmul.f32 %v907, 1.442695
    %v918 = vpow.pop %v917
    %v919 = vmul.f32 %v908, 1.442695
    %v920 = vpow.pop %v919
    %v921 = vmul.f32 %v909, 1.442695
    %v922 = vpow.pop %v921
    %v923 = vmul.f32 %v910, 1.442695
    %v924 = vpow.pop %v923
    %v925 = vmul.f32 %v911, 1.442695
    %v926 = vpow.pop %v925
    %v927 = vmul.f32 %v912, 1.442695
    %v928 = vpow.pop %v927
    %v929 = vsel %vm228, %v914, 0.0
    %930 = vadd.xlane.f32.xlu0 %v929
    %v931 = vpop.xlane.xlu0 %930
    %v932 = vsel %vm228, %v916, 0.0
    %933 = vadd.xlane.f32.xlu0 %v932
    %v934 = vpop.xlane.xlu0 %933
    %v935 = vsel %vm228, %v918, 0.0
    %936 = vadd.xlane.f32.xlu0 %v935
    %v937 = vpop.xlane.xlu0 %936
    %v938 = vsel %vm228, %v920, 0.0
    %939 = vadd.xlane.f32.xlu0 %v938
    %v940 = vpop.xlane.xlu0 %939
    %v941 = vsel %vm228, %v922, 0.0
    %942 = vadd.xlane.f32.xlu0 %v941
    %v943 = vpop.xlane.xlu0 %942
    %v944 = vsel %vm228, %v924, 0.0
    %945 = vadd.xlane.f32.xlu0 %v944
    %v946 = vpop.xlane.xlu0 %945
    %v947 = vsel %vm228, %v926, 0.0
    %948 = vadd.xlane.f32.xlu0 %v947
    %v949 = vpop.xlane.xlu0 %948
    %v950 = vsel %vm228, %v928, 0.0
    %951 = vadd.xlane.f32.xlu0 %v950
    %v952 = vpop.xlane.xlu0 %951
    %v953 = vrcp.pop %v931
    %v954 = vrcp.pop %v934
    %v955 = vrcp.pop %v937
    %v956 = vrcp.pop %v940
    %v957 = vrcp.pop %v943
    %v958 = vrcp.pop %v946
    %v959 = vrcp.pop %v949
    %v960 = vrcp.pop %v952
    %v961 = vmul.f32 %v914, %v953
    %v962 = vmul.f32 %v916, %v954
    %v963 = vmul.f32 %v918, %v955
    %v964 = vmul.f32 %v920, %v956
    %v965 = vmul.f32 %v922, %v957
    %v966 = vmul.f32 %v924, %v958
    %v967 = vmul.f32 %v926, %v959
    %v968 = vmul.f32 %v928, %v960
    %v969 = vpack.c.bf16 %v962, %v961
    %v970 = vpack.c.bf16 %v964, %v963
    %v971 = vpack.c.bf16 %v966, %v965
    %v972 = vpack.c.bf16 %v968, %v967
    %974 = vrot.lane.b32.xlu0 %v317, 64
    %v975 = vpop.permute.xlu0 %974
    %v977 = vsel %vm228, %v975, 0
    %v980 = vsel %vm228, %v969, 0
    %v983 = vsel %vm228, %v970, 0
    %v986 = vsel %vm228, %v971, 0
    %v989 = vsel %vm228, %v972, 0
    %991 = vmatprep.subr.bf16.mxu0 0
    %992 = vmatpush1.bf16.xpose.msra.mxu0 %v980
    %993 = vmatprep.subr.bf16.mxu0 0
    %994 = vmatpush1.bf16.xpose.msra.mxu0 %v983
    %995 = vmatprep.subr.bf16.mxu0 0
    %996 = vmatpush1.bf16.xpose.msra.mxu0 %v986
    %997 = vmatprep.subr.bf16.mxu0 0
    %998 = vmatpush1.bf16.xpose.msra.mxu0 %v989
    %999 = vmatprep.subr.bf16.mxu0 0
    %1000 = vmatpush1.bf16.xpose.msra.mxu0 0
    %1001 = vmatprep.subr.bf16.mxu0 0
    %1002 = vmatpush1.bf16.xpose.msra.mxu0 0
    %1003 = vmatprep.subr.bf16.mxu0 0
    %1004 = vmatpush1.bf16.xpose.msra.mxu0 0
    %1005 = vmatprep.subr.bf16.mxu0 0
    %1006 = vmatpush1.bf16.xpose.msra.mxu0 0
    %1007 = vmatprep.subr.bf16.mxu0 0
    %1008 = vmatpush1.bf16.xpose.msra.mxu0 0
    %1009 = vmatprep.subr.bf16.mxu0 0
    %1010 = vmatpush1.bf16.xpose.msra.mxu0 0
    %1011 = vmatprep.subr.bf16.mxu0 0
    %1012 = vmatpush1.bf16.xpose.msra.mxu0 0
    %1013 = vmatprep.subr.bf16.mxu0 0
    %1014 = vmatpush1.bf16.xpose.msra.mxu0 0
    %1015 = vmatprep.subr.bf16.mxu0 0
    %1016 = vmatpush1.bf16.xpose.msra.mxu0 0
    %1017 = vmatprep.subr.bf16.mxu0 0
    %1018 = vmatpush1.bf16.xpose.msra.mxu0 0
    %1019 = vmatprep.subr.bf16.mxu0 0
    %1020 = vmatpush1.bf16.xpose.msra.mxu0 0
    %1021 = vmatprep.subr.bf16.mxu0 0
    %1022 = vmatpush1.bf16.xpose.msra.mxu0 0
    %1023 = vmatprep.mubr.bf16.mxu0 0
    %1024 = vmatmul.mubr.bf16.gmra.mrb[0].mxu0 %v977
    %v1025 = vpop.f32.mrb[0].mxu0
    %v1026 = vadd.f32 0.0, %v1025
    %v1027 = vpop.f32.mrb[0].mxu0
    %v1028 = vpop.f32.mrb[0].mxu0
    %v1029 = vadd.f32 0.0, %v1028
    %v1030 = vpop.f32.mrb[0].mxu0
    %1031 = vdwg.mxu0
    %v1033 = vsel %vm228, %v961, 0
    %v1036 = vsel %vm228, %v962, 0
    %v1039 = vsel %vm228, %v963, 0
    %v1042 = vsel %vm228, %v964, 0
    %v1045 = vsel %vm228, %v965, 0
    %v1048 = vsel %vm228, %v966, 0
    %v1051 = vsel %vm228, %v967, 0
    %v1054 = vsel %vm228, %v968, 0
    %1056 = vmatprep.subr.mxu0 0.0
    %1057 = vmatpush1.xpose.msra.mxu0 %v1033
    %1058 = vmatprep.subr.mxu0 0.0
    %1059 = vmatpush1.xpose.msra.mxu0 %v1036
    %1060 = vmatprep.subr.mxu0 0.0
    %1061 = vmatpush1.xpose.msra.mxu0 %v1039
    %1062 = vmatprep.subr.mxu0 0.0
    %1063 = vmatpush1.xpose.msra.mxu0 %v1042
    %1064 = vmatprep.subr.mxu0 0.0
    %1065 = vmatpush1.xpose.msra.mxu0 %v1045
    %1066 = vmatprep.subr.mxu0 0.0
    %1067 = vmatpush1.xpose.msra.mxu0 %v1048
    %1068 = vmatprep.subr.mxu0 0.0
    %1069 = vmatpush1.xpose.msra.mxu0 %v1051
    %1070 = vmatprep.subr.mxu0 0.0
    %1071 = vmatpush1.xpose.msra.mxu0 %v1054
    %1072 = vmatprep.subr.mxu0 0.0
    %1073 = vmatpush1.xpose.msra.mxu0 0.0
    %1074 = vmatprep.subr.mxu0 0.0
    %1075 = vmatpush1.xpose.msra.mxu0 0.0
    %1076 = vmatprep.subr.mxu0 0.0
    %1077 = vmatpush1.xpose.msra.mxu0 0.0
    %1078 = vmatprep.subr.mxu0 0.0
    %1079 = vmatpush1.xpose.msra.mxu0 0.0
    %1080 = vmatprep.subr.mxu0 0.0
    %1081 = vmatpush1.xpose.msra.mxu0 0.0
    %1082 = vmatprep.subr.mxu0 0.0
    %1083 = vmatpush1.xpose.msra.mxu0 0.0
    %1084 = vmatprep.subr.mxu0 0.0
    %1085 = vmatpush1.xpose.msra.mxu0 0.0
    %1086 = vmatprep.subr.mxu0 0.0
    %1087 = vmatpush1.xpose.msra.mxu0 0.0
    %1088 = vmatprep.subr.mxu0 0.0
    %1089 = vmatpush1.xpose.msra.mxu0 0.0
    %1090 = vmatprep.subr.mxu0 0.0
    %1091 = vmatpush1.xpose.msra.mxu0 0.0
    %1092 = vmatprep.subr.mxu0 0.0
    %1093 = vmatpush1.xpose.msra.mxu0 0.0
    %1094 = vmatprep.subr.mxu0 0.0
    %1095 = vmatpush1.xpose.msra.mxu0 0.0
    %1096 = vmatprep.subr.mxu0 0.0
    %1097 = vmatpush1.xpose.msra.mxu0 0.0
    %1098 = vmatprep.subr.mxu0 0.0
    %1099 = vmatpush1.xpose.msra.mxu0 0.0
    %1100 = vmatprep.subr.mxu0 0.0
    %1101 = vmatpush1.xpose.msra.mxu0 0.0
    %1102 = vmatprep.subr.mxu0 0.0
    %1103 = vmatpush1.xpose.msra.mxu0 0.0
    %1104 = vmatprep.subr.mxu0 0.0
    %1105 = vmatpush1.xpose.msra.mxu0 0.0
    %1106 = vmatprep.subr.mxu0 0.0
    %1107 = vmatpush1.xpose.msra.mxu0 0.0
    %1108 = vmatprep.subr.mxu0 0.0
    %1109 = vmatpush1.xpose.msra.mxu0 0.0
    %1110 = vmatprep.subr.mxu0 0.0
    %1111 = vmatpush1.xpose.msra.mxu0 0.0
    %1112 = vmatprep.subr.mxu0 0.0
    %1113 = vmatpush1.xpose.msra.mxu0 0.0
    %1114 = vmatprep.subr.mxu0 0.0
    %1115 = vmatpush1.xpose.msra.mxu0 0.0
    %1116 = vmatprep.subr.mxu0 0.0
    %1117 = vmatpush1.xpose.msra.mxu0 0.0
    %1118 = vmatprep.subr.mxu0 0.0
    %1119 = vmatpush1.xpose.msra.mxu0 0.0
    %1120 = vmatprep.mubr.f32.mxu0 0.0
    %1121 = vmatmul.mubr.f32.gmra.mrb[0].mxu0 %v379
    %v1122 = vpop.f32.mrb[0].mxu0
    %v1123 = vadd.f32 0.0, %v1122
    %v1124 = vpop.f32.mrb[0].mxu0
    %1125 = vdwg.mxu0
    %v1126 = vmul.f32 %v961, %v961
    %v1127 = vmul.f32 %v962, %v962
    %v1128 = vmul.f32 %v963, %v963
    %v1129 = vmul.f32 %v964, %v964
    %v1130 = vmul.f32 %v965, %v965
    %v1131 = vmul.f32 %v966, %v966
    %v1132 = vmul.f32 %v967, %v967
    %v1133 = vmul.f32 %v968, %v968
    %v1135 = vsel %vm228, %v1126, 0
    %v1138 = vsel %vm228, %v1127, 0
    %v1141 = vsel %vm228, %v1128, 0
    %v1144 = vsel %vm228, %v1129, 0
    %v1147 = vsel %vm228, %v1130, 0
    %v1150 = vsel %vm228, %v1131, 0
    %v1153 = vsel %vm228, %v1132, 0
    %v1156 = vsel %vm228, %v1133, 0
    %1158 = vmatprep.subr.mxu0 0.0
    %1159 = vmatpush1.xpose.msra.mxu0 %v1135
    %1160 = vmatprep.subr.mxu0 0.0
    %1161 = vmatpush1.xpose.msra.mxu0 %v1138
    %1162 = vmatprep.subr.mxu0 0.0
    %1163 = vmatpush1.xpose.msra.mxu0 %v1141
    %1164 = vmatprep.subr.mxu0 0.0
    %1165 = vmatpush1.xpose.msra.mxu0 %v1144
    %1166 = vmatprep.subr.mxu0 0.0
    %1167 = vmatpush1.xpose.msra.mxu0 %v1147
    %1168 = vmatprep.subr.mxu0 0.0
    %1169 = vmatpush1.xpose.msra.mxu0 %v1150
    %1170 = vmatprep.subr.mxu0 0.0
    %1171 = vmatpush1.xpose.msra.mxu0 %v1153
    %1172 = vmatprep.subr.mxu0 0.0
    %1173 = vmatpush1.xpose.msra.mxu0 %v1156
    %1174 = vmatprep.subr.mxu0 0.0
    %1175 = vmatpush1.xpose.msra.mxu0 0.0
    %1176 = vmatprep.subr.mxu0 0.0
    %1177 = vmatpush1.xpose.msra.mxu0 0.0
    %1178 = vmatprep.subr.mxu0 0.0
    %1179 = vmatpush1.xpose.msra.mxu0 0.0
    %1180 = vmatprep.subr.mxu0 0.0
    %1181 = vmatpush1.xpose.msra.mxu0 0.0
    %1182 = vmatprep.subr.mxu0 0.0
    %1183 = vmatpush1.xpose.msra.mxu0 0.0
    %1184 = vmatprep.subr.mxu0 0.0
    %1185 = vmatpush1.xpose.msra.mxu0 0.0
    %1186 = vmatprep.subr.mxu0 0.0
    %1187 = vmatpush1.xpose.msra.mxu0 0.0
    %1188 = vmatprep.subr.mxu0 0.0
    %1189 = vmatpush1.xpose.msra.mxu0 0.0
    %1190 = vmatprep.subr.mxu0 0.0
    %1191 = vmatpush1.xpose.msra.mxu0 0.0
    %1192 = vmatprep.subr.mxu0 0.0
    %1193 = vmatpush1.xpose.msra.mxu0 0.0
    %1194 = vmatprep.subr.mxu0 0.0
    %1195 = vmatpush1.xpose.msra.mxu0 0.0
    %1196 = vmatprep.subr.mxu0 0.0
    %1197 = vmatpush1.xpose.msra.mxu0 0.0
    %1198 = vmatprep.subr.mxu0 0.0
    %1199 = vmatpush1.xpose.msra.mxu0 0.0
    %1200 = vmatprep.subr.mxu0 0.0
    %1201 = vmatpush1.xpose.msra.mxu0 0.0
    %1202 = vmatprep.subr.mxu0 0.0
    %1203 = vmatpush1.xpose.msra.mxu0 0.0
    %1204 = vmatprep.subr.mxu0 0.0
    %1205 = vmatpush1.xpose.msra.mxu0 0.0
    %1206 = vmatprep.subr.mxu0 0.0
    %1207 = vmatpush1.xpose.msra.mxu0 0.0
    %1208 = vmatprep.subr.mxu0 0.0
    %1209 = vmatpush1.xpose.msra.mxu0 0.0
    %1210 = vmatprep.subr.mxu0 0.0
    %1211 = vmatpush1.xpose.msra.mxu0 0.0
    %1212 = vmatprep.subr.mxu0 0.0
    %1213 = vmatpush1.xpose.msra.mxu0 0.0
    %1214 = vmatprep.subr.mxu0 0.0
    %1215 = vmatpush1.xpose.msra.mxu0 0.0
    %1216 = vmatprep.subr.mxu0 0.0
    %1217 = vmatpush1.xpose.msra.mxu0 0.0
    %1218 = vmatprep.subr.mxu0 0.0
    %1219 = vmatpush1.xpose.msra.mxu0 0.0
    %1220 = vmatprep.subr.mxu0 0.0
    %1221 = vmatpush1.xpose.msra.mxu0 0.0
    %1222 = vmatprep.mubr.f32.mxu0 0.0
    %1223 = vmatmul.mubr.f32.gmra.mrb[0].mxu0 %v379
    %v1224 = vpop.f32.mrb[0].mxu0
    %v1225 = vadd.f32 0.0, %v1224
    %v1226 = vpop.f32.mrb[0].mxu0
    %1227 = vdwg.mxu0
    %v1228 = vmul.f32 %v1123, 0.015625
    %v1229 = vmul.f32 %v1123, %v1228
    %v1230 = vsub.f32 %v1225, %v1229
    %v1231 = vmax.f32 %v1230, 0.0
    %v1232 = vmul.f32 %v1231, 0.015873017
    %v1233 = vrsqrt.pop %v1232
    %v1234 = vmul.f32 %v1232, %v1233
    %vm1235 = vcmp.eq.f32.partialorder %v1232, inf
    %v1236 = vsel %vm1235, %v1232, %v1234
    %vm1237 = vcmp.eq.f32.partialorder %v1232, 0.0
    %v1238 = vand.u32 %v1232, 2147483648
    %v1239 = vsel %vm1237, %v1238, %v1236
    %vm1240 = vcmask 1048064
    %v1241 = vsel %vm1240, %v114, 0.0
    %v1242 = vsel %vm1240, %v117, 0.0
    %v1243 = vadd.f32 %v1241, %v1242
    %v1244 = vrot.slane %v1243, 4
    %v1245 = vadd.f32 %v1243, %v1244
    %v1246 = vrot.slane %v1245, 2
    %v1247 = vadd.f32 %v1245, %v1246
    %v1248 = vrot.slane %v1247, 1
    %v1249 = vadd.f32 %v1247, %v1248
    %v1250 = vmul.f32 %v1249, %v598
    %v1251 = vmul.f32 %v1239, %v600
    %1253 = vrot.lane.b32.xlu0 %v1250, 64
    %v1254 = vpop.permute.xlu0 %1253
    %v1256 = vsel %vm159, %v1251, %v1254
    %1258 = vrot.lane.b32.xlu0 %v1256, 73
    %v1259 = vpop.permute.xlu0 %1258
    %1261 = vrot.lane.b32.xlu0 %v1256, 9
    %v1262 = vpop.permute.xlu0 %1261
    %v1264 = vsel %vm610, %v1259, %v1262
    %v1265 = vmul.f32 %v39, %v1264
    %v1266 = vadd.f32 %v1265, 0.0
    %v1267 = vmul.f32 %v40, %v1264
    %v1269 = vrot.slane %v1267, 1
    %v1271 = vadd.f32 %v1266, %v1269
    %1272 = vrot.lane.b32.xlu0 %v1256, 72
    %v1273 = vpop.permute.xlu0 %1272
    %1275 = vrot.lane.b32.xlu0 %v1256, 8
    %v1276 = vpop.permute.xlu0 %1275
    %v1278 = vsel %vm625, %v1273, %v1276
    %v1280 = vrot.slane %v1278, 7
    %v1282 = vmul.f32 %v39, %v1280
    %v1284 = vrot.slane %v1282, 1
    %v1286 = vadd.f32 %v1271, %v1284
    %v1287 = vmul.f32 %v40, %v1280
    %v1289 = vrot.slane %v1287, 2
    %v1291 = vadd.f32 %v1286, %v1289
    %1292 = vrot.lane.b32.xlu0 %v1256, 71
    %v1293 = vpop.permute.xlu0 %1292
    %1295 = vrot.lane.b32.xlu0 %v1256, 7
    %v1296 = vpop.permute.xlu0 %1295
    %v1298 = vsel %vm646, %v1293, %v1296
    %v1300 = vrot.slane %v1298, 6
    %v1302 = vmul.f32 %v39, %v1300
    %v1304 = vrot.slane %v1302, 2
    %v1306 = vadd.f32 %v1291, %v1304
    %v1307 = vmul.f32 %v40, %v1300
    %v1309 = vrot.slane %v1307, 3
    %v1311 = vadd.f32 %v1306, %v1309
    %1312 = vrot.lane.b32.xlu0 %v1256, 65
    %v1313 = vpop.permute.xlu0 %1312
    %1315 = vrot.lane.b32.xlu0 %v1256, 1
    %v1316 = vpop.permute.xlu0 %1315
    %v1318 = vsel %vm667, %v1313, %v1316
    %v1320 = vrot.slane %v1318, 5
    %v1322 = vmul.f32 %v39, %v1320
    %v1324 = vrot.slane %v1322, 3
    %v1326 = vadd.f32 %v1311, %v1324
    %v1327 = vmul.f32 %v40, %v1320
    %v1329 = vrot.slane %v1327, 4
    %v1331 = vadd.f32 %v1326, %v1329
    %v1332 = vrot.slane %v1256, 4
    %v1334 = vmul.f32 %v39, %v1332
    %v1336 = vrot.slane %v1334, 4
    %v1338 = vadd.f32 %v1331, %v1336
    %v1339 = vmul.f32 %v40, %v1332
    %v1341 = vrot.slane %v1339, 5
    %v1343 = vadd.f32 %v1338, %v1341
    %1344 = vrot.lane.b32.xlu0 %v1256, 127
    %v1345 = vpop.permute.xlu0 %1344
    %1347 = vrot.lane.b32.xlu0 %v1256, 63
    %v1348 = vpop.permute.xlu0 %1347
    %v1350 = vsel %vm700, %v1345, %v1348
    %v1352 = vrot.slane %v1350, 3
    %v1354 = vmul.f32 %v39, %v1352
    %v1356 = vrot.slane %v1354, 5
    %v1358 = vadd.f32 %v1343, %v1356
    %v1359 = vmul.f32 %v40, %v1352
    %v1361 = vrot.slane %v1359, 6
    %v1363 = vadd.f32 %v1358, %v1361
    %1364 = vrot.lane.b32.xlu0 %v1256, 121
    %v1365 = vpop.permute.xlu0 %1364
    %1367 = vrot.lane.b32.xlu0 %v1256, 57
    %v1368 = vpop.permute.xlu0 %1367
    %v1370 = vsel %vm721, %v1365, %v1368
    %v1372 = vrot.slane %v1370, 2
    %v1374 = vmul.f32 %v39, %v1372
    %v1376 = vrot.slane %v1374, 6
    %v1378 = vadd.f32 %v1363, %v1376
    %v1379 = vmul.f32 %v40, %v1372
    %v1381 = vrot.slane %v1379, 7
    %v1383 = vadd.f32 %v1378, %v1381
    %1384 = vrot.lane.b32.xlu0 %v1256, 120
    %v1385 = vpop.permute.xlu0 %1384
    %1387 = vrot.lane.b32.xlu0 %v1256, 56
    %v1388 = vpop.permute.xlu0 %1387
    %v1390 = vsel %vm742, %v1385, %v1388
    %v1392 = vrot.slane %v1390, 1
    %v1394 = vmul.f32 %v39, %v1392
    %v1396 = vrot.slane %v1394, 7
    %v1398 = vadd.f32 %v1383, %v1396
    %v1399 = vmul.f32 %v41, %v1392
    %v1400 = vadd.f32 %v1398, %v1399
    %1401 = vrot.lane.b32.xlu0 %v1256, 119
    %v1402 = vpop.permute.xlu0 %1401
    %1404 = vrot.lane.b32.xlu0 %v1256, 55
    %v1405 = vpop.permute.xlu0 %1404
    %v1407 = vsel %vm760, %v1402, %v1405
    %v1408 = vmul.f32 %v40, %v1407
    %v1409 = vadd.f32 %v1400, %v1408
    %v1410 = vmul.f32 %v41, %v1407
    %v1412 = vrot.slane %v1410, 1
    %v1414 = vadd.f32 %v1409, %v1412
    %v1415 = vlaneseq
    %v1416 = vshrl.u32 %v1415, 7
    %v1417 = vsub.s32 0, %v1416
    %v1418 = vrot.slane %v1414, %v1417
    %v1419 = vmul.f32 %v1026, %v1418
    %v1420 = vmul.f32 %v1029, %v1418
    %v1421 = vmul.f32 %v775, %v1419
    %v1422 = vmul.f32 %v775, %v1420
    %1425 = vrot.lane.b32.xlu0 %v35, 64
    %v1426 = vpop.permute.xlu0 %1425
    %1427 = vrot.lane.b32.xlu0 %v36, 64
    %v1428 = vpop.permute.xlu0 %1427
    %v1431 = vadd.f32 %v1421, %v1426
    %v1432 = vadd.f32 %v1422, %v1428
    %1435 = vrot.lane.b32.xlu0 %v1431, 64
    %v1436 = vpop.permute.xlu0 %1435
    %1437 = vrot.lane.b32.xlu0 %v1432, 64
    %v1438 = vpop.permute.xlu0 %1437
    %v1441 = vsel %vm228, %v778, %v1436
    %v1442 = vsel %vm228, %v779, %v1438
    %1443 = vst [vmem:[#allocation5] sm:$0xff] %v1441
    %1444 = vst [vmem:[#allocation5 + $0x8] sm:$0xff] %v1442
    // Predicated region
    $region26: #{tpu_custom_call.1} parent=1 // pred_check
      _
    $region27: #{tpu_custom_call.1} parent=1 // pred_check_branch
      %1446 = sbr.rel (0) target = $region29
    $region28: #{tpu_custom_call.1} parent=1 // pred_region
      %s1448 = ssub.s32 256, 256
      %1449 = vsyncadd [#allocation3], %s1448
      %s1450 = sshll.u32 [#allocation5], 4
      %s1451 = int_to_ptr.vmem [resolvable:$true] %s1450
      %1456 = dma.vmem_to_hbm [thread:$0]  %s1451, 256, %s5, [#allocation3], 128, 128, 8
    $region29: #{tpu_custom_call.1} parent=1 // pred_fallthru
      _
    // Predicated region
    $region30: #{tpu_custom_call.1} parent=1 // pred_check
      _
    $region31: #{tpu_custom_call.1} parent=1 // pred_check_branch
      %1458 = sbr.rel (0) target = $region33
    $region32: #{tpu_custom_call.1} parent=1 // pred_region
      %1459 = dma.done [#allocation3], 256
    $region33: #{tpu_custom_call.1} parent=1 // pred_fallthru
      _
    %1460 = vsyncpa [#allocation3], 1
    %1461 = vsyncpa [#allocation4], 1

</llo_original>
